<compile_context>
chip_gen: v7x
topology: tpu7x:2x2x1
jax: 0.10.0
libtpu: 0.0.40
codegen_flags: <defaults>
</compile_context>

<pallas_src>
import math
from functools import partial

import jax
import jax.numpy as jnp
from jax import lax
from jax.experimental import pallas as pl
from jax.experimental.pallas import tpu as pltpu


def _conv_swish_kernel(w_ref, b_ref, x_ref, o_ref, *, cin, th, width):
    """One (batch, row-tile) grid step.

    w_ref : (Cout, 9*Cin)       bf16 conv weights, K ordered (kh, kw, cin)  [resident]
    b_ref : (Cout, 1)           f32 bias                                    [resident]
    x_ref : (Cin, th+2, W+2)    bf16 zero-padded, row-haloed input tile
    o_ref : (Cout, th*W)        bf16 conv + bias + swish, lane-dense flat HW
    """
    t = th * width
    # Build the (9*Cin, T) patch matrix in VMEM from the 9 shifted taps of the
    # haloed tile (pad=1 already folded in), tap-major to match the weight flatten.
    taps = [
        x_ref[:, kh:kh + th, kw:kw + width].reshape(cin, t)
        for kh in range(3) for kw in range(3)
    ]
    patches = jnp.concatenate(taps, axis=0)                     # (9*Cin, T)
    # Single fat-K MXU matmul, f32 accumulation.
    acc = jnp.dot(w_ref[...], patches, preferred_element_type=jnp.float32)
    acc = acc + b_ref[...]                                      # (Cout, T) + (Cout, 1)
    # swish(x) = x * sigmoid(x); exp on the EUP, approx reciprocal off the VALU.
    y = acc * pl.reciprocal(1.0 + jnp.exp(-acc), approx=True)
    o_ref[...] = y.astype(o_ref.dtype)


def _vmem_capacity_bytes():
    try:
        return int(pltpu.get_tpu_info().vmem_capacity_bytes)
    except Exception:
        return 64 << 20  # conservative fallback (v7x per-TensorCore VMEM)


def _pick_tile_rows(h, width, cin, cout, tile_rows=None):
    """Rows per spatial tile.

    tile_rows * W must be a multiple of 128 (lane-dense, BlockSpec-legal output
    blocks) unless a single tile covers all of H.  The tile is sized so the
    per-step VMEM (double-buffered in/out blocks, the (9*Cin, T) patch matrix,
    and the f32 accumulator) fits a generation-aware budget.
    """
    th_min = 128 // math.gcd(width, 128)
    if tile_rows is None:
        budget = min(_vmem_capacity_bytes() // 3, 24 << 20)
        per_lane = 48 * cin + 16 * cout + 128  # rough VMEM bytes per output lane
        tile_rows = max(1, budget // (per_lane * width))
    if tile_rows >= h:
        return h
    th = (tile_rows // th_min) * th_min
    if th < th_min:
        th = th_min
    return h if th >= h else th


def upsample_block(x_nchw, weight_oihw, bias, *, r=2, tile_rows=None,
                   compute_dtype=jnp.bfloat16, out_dtype=jnp.bfloat16):
    """Equivalent of upsampleBlock.forward for NCHW input (returns out_dtype)."""
    n, cin, h, width = x_nchw.shape
    cout = weight_oihw.shape[0]
    assert cout % (r * r) == 0, "PixelShuffle requires out_channels % r^2 == 0"
    k = 9 * cin

    th = _pick_tile_rows(h, width, cin, cout, tile_rows)
    h_pad = ((h + th - 1) // th) * th           # zero-row pad so tiles divide H
    n_tiles = h_pad // th
    t = th * width

    # Zero-pad (conv pad=1 plus the bottom row padding) and cut overlapping row
    # tiles with a 1-row halo; this is the only activation tensor the kernel
    # reads (~(1 + 2/th)x of x instead of the former 9x im2col in HBM).
    xp = jnp.pad(x_nchw, ((0, 0), (0, 0), (1, 1 + h_pad - h), (1, 1)))
    xp = xp.astype(compute_dtype)               # (N, Cin, H_pad+2, W+2)
    if n_tiles == 1:
        xtiles = xp[:, None]
    else:
        xtiles = jnp.stack(
            [xp[:, :, i * th: i * th + th + 2, :] for i in range(n_tiles)],
            axis=1)
    # xtiles: (N, n_tiles, Cin, th+2, W+2)

    # Weights flattened tap-major / cin-minor to match the in-kernel patch build.
    w2 = weight_oihw.transpose(0, 2, 3, 1).reshape(cout, k).astype(compute_dtype)
    b2 = bias.reshape(cout, 1).astype(jnp.float32)

    vmem_limit = int(min(_vmem_capacity_bytes() * 3 // 4, 96 << 20))

    kernel = partial(_conv_swish_kernel, cin=cin, th=th, width=width)
    y = pl.pallas_call(
        kernel,
        out_shape=jax.ShapeDtypeStruct((n, cout, n_tiles * t), out_dtype),
        grid=(n, n_tiles),
        in_specs=[
            pl.BlockSpec((cout, k), lambda b, i: (0, 0)),           # weights, resident
            pl.BlockSpec((cout, 1), lambda b, i: (0, 0)),           # bias, resident
            pl.BlockSpec((None, None, cin, th + 2, width + 2),
                         lambda b, i: (b, i, 0, 0, 0)),             # haloed input tile
        ],
        out_specs=pl.BlockSpec((None, cout, t), lambda b, i: (b, 0, i)),
        compiler_params=pltpu.CompilerParams(
            dimension_semantics=("parallel", "parallel"),
            vmem_limit_bytes=vmem_limit,
        ),
    )(w2, b2, xtiles)

    # Drop padded rows (no-op when th | H), then the PixelShuffle(r) permutation
    # (pure data permutation, left as XLA glue on the bf16 tensor).
    y = y[:, :, : h * width]
    c = cout // (r * r)
    y = (
        y.reshape(n, c, r, r, h, width)
        .transpose(0, 1, 4, 2, 5, 3)
        .reshape(n, c, h * r, width * r)
    )
    return y


def _reference(x_nchw, weight_oihw, bias, r=2):
    """Pure-JAX f32 reference matching the PyTorch forward exactly."""
    y = lax.conv_general_dilated(
        x_nchw, weight_oihw, window_strides=(1, 1),
        padding=((1, 1), (1, 1)),
        dimension_numbers=("NCHW", "OIHW", "NCHW"),
    ) + bias[None, :, None, None]
    n, cr2, h, w = y.shape
    c = cr2 // (r * r)
    y = (y.reshape(n, c, r, r, h, w).transpose(0, 1, 4, 2, 5, 3)
           .reshape(n, c, h * r, w * r))
    return y * jax.nn.sigmoid(y)


def _make_inputs(key, n, cin, cout, h, w):
    key_x, key_w, key_b = jax.random.split(key, 3)
    x = jax.random.normal(key_x, (n, cin, h, w), jnp.float32)
    fan_in = cin * 9
    bound = 1.0 / math.sqrt(fan_in)
    weight = jax.random.uniform(key_w, (cout, cin, 3, 3), jnp.float32, -bound, bound)
    b = jax.random.uniform(key_b, (cout,), jnp.float32, -bound, bound)
    return x, weight, b


if __name__ == "__main__":
    key = jax.random.PRNGKey(0)
    k1, k2 = jax.random.split(key)

    # Main example: batch=2, in_channels=4, out_channels=16 (divisible by r^2),
    # 16x16 spatial -> single full-extent spatial tile per image.
    x, w, b = _make_inputs(k1, n=2, cin=4, cout=16, h=16, w=16)
    out = jax.block_until_ready(jax.jit(upsample_block)(x, w, b))
    ref = _reference(x, w, b)
    assert out.shape == (2, 4, 32, 32)
    assert jnp.allclose(out.astype(jnp.float32), ref, atol=3e-2, rtol=3e-2), \
        "mismatch vs reference (main case)"

    # Multi-tile path: forces 16-row tiles -> 3 row tiles with H padded 36->48,
    # exercising the haloed-tile build, row padding and the parallel spatial grid.
    xb, wb, bb = _make_inputs(k2, n=1, cin=3, cout=8, h=36, w=24)
    out_b = jax.block_until_ready(
        jax.jit(partial(upsample_block, tile_rows=16))(xb, wb, bb))
    ref_b = _reference(xb, wb, bb)
    assert out_b.shape == (1, 2, 72, 48)
    assert jnp.allclose(out_b.astype(jnp.float32), ref_b, atol=3e-2, rtol=3e-2), \
        "mismatch vs reference (multi-tile case)"

    print("KERNEL_OK")
</pallas_src>

<mosaic_0001>
module attributes {stable_mosaic.version = 11 : i64} {
  func.func @_conv_swish_kernel(%arg0: i32, %arg1: i32, %arg2: memref<16x36xbf16, #tpu.memory_space<vmem>>, %arg3: memref<16x1xf32, #tpu.memory_space<vmem>>, %arg4: memref<1x1x4x18x18xbf16, #tpu.memory_space<vmem>>, %arg5: memref<1x16x256xbf16, #tpu.memory_space<vmem>>) attributes {dimension_semantics = [#tpu.dimension_semantics<parallel>, #tpu.dimension_semantics<parallel>], iteration_bounds = array<i64: 2, 1>, scalar_prefetch = 0 : i64, scratch_operands = 0 : i64, tpu.core_type = #tpu.core_type<tc>, window_params = [{pipeline_mode = #tpu.pipeline_mode<synchronous>, transform_indices = @transform_0, window_bounds = array<i64: 16, 36>}, {pipeline_mode = #tpu.pipeline_mode<synchronous>, transform_indices = @transform_1, window_bounds = array<i64: 16, 1>}, {transform_indices = @transform_2, window_bounds = array<i64: 1, 1, 4, 18, 18>}, {transform_indices = @transform_3, window_bounds = array<i64: 1, 16, 256>}]} {
    %c0 = arith.constant 0 : index
    %c0_0 = arith.constant 0 : index
    %c0_1 = arith.constant 0 : index
    %c0_2 = arith.constant 0 : index
    %c0_3 = arith.constant 0 : index
    %0 = vector.load %arg4[%c0, %c0_0, %c0_1, %c0_2, %c0_3] : memref<1x1x4x18x18xbf16, #tpu.memory_space<vmem>>, vector<1x1x4x16x16xbf16>
    %1 = vector.shape_cast %0 : vector<1x1x4x16x16xbf16> to vector<4x16x16xbf16>
    %2 = vector.shape_cast %1 : vector<4x16x16xbf16> to vector<4x256xbf16>
    %c0_4 = arith.constant 0 : index
    %c0_5 = arith.constant 0 : index
    %c0_6 = arith.constant 0 : index
    %c0_7 = arith.constant 0 : index
    %c1 = arith.constant 1 : index
    %3 = vector.load %arg4[%c0_4, %c0_5, %c0_6, %c0_7, %c1] : memref<1x1x4x18x18xbf16, #tpu.memory_space<vmem>>, vector<1x1x4x16x16xbf16>
    %4 = vector.shape_cast %3 : vector<1x1x4x16x16xbf16> to vector<4x16x16xbf16>
    %5 = vector.shape_cast %4 : vector<4x16x16xbf16> to vector<4x256xbf16>
    %c0_8 = arith.constant 0 : index
    %c0_9 = arith.constant 0 : index
    %c0_10 = arith.constant 0 : index
    %c0_11 = arith.constant 0 : index
    %c2 = arith.constant 2 : index
    %6 = vector.load %arg4[%c0_8, %c0_9, %c0_10, %c0_11, %c2] : memref<1x1x4x18x18xbf16, #tpu.memory_space<vmem>>, vector<1x1x4x16x16xbf16>
    %7 = vector.shape_cast %6 : vector<1x1x4x16x16xbf16> to vector<4x16x16xbf16>
    %8 = vector.shape_cast %7 : vector<4x16x16xbf16> to vector<4x256xbf16>
    %c0_12 = arith.constant 0 : index
    %c0_13 = arith.constant 0 : index
    %c0_14 = arith.constant 0 : index
    %c1_15 = arith.constant 1 : index
    %c0_16 = arith.constant 0 : index
    %9 = vector.load %arg4[%c0_12, %c0_13, %c0_14, %c1_15, %c0_16] : memref<1x1x4x18x18xbf16, #tpu.memory_space<vmem>>, vector<1x1x4x16x16xbf16>
    %10 = vector.shape_cast %9 : vector<1x1x4x16x16xbf16> to vector<4x16x16xbf16>
    %11 = vector.shape_cast %10 : vector<4x16x16xbf16> to vector<4x256xbf16>
    %c0_17 = arith.constant 0 : index
    %c0_18 = arith.constant 0 : index
    %c0_19 = arith.constant 0 : index
    %c1_20 = arith.constant 1 : index
    %c1_21 = arith.constant 1 : index
    %12 = vector.load %arg4[%c0_17, %c0_18, %c0_19, %c1_20, %c1_21] : memref<1x1x4x18x18xbf16, #tpu.memory_space<vmem>>, vector<1x1x4x16x16xbf16>
    %13 = vector.shape_cast %12 : vector<1x1x4x16x16xbf16> to vector<4x16x16xbf16>
    %14 = vector.shape_cast %13 : vector<4x16x16xbf16> to vector<4x256xbf16>
    %c0_22 = arith.constant 0 : index
    %c0_23 = arith.constant 0 : index
    %c0_24 = arith.constant 0 : index
    %c1_25 = arith.constant 1 : index
    %c2_26 = arith.constant 2 : index
    %15 = vector.load %arg4[%c0_22, %c0_23, %c0_24, %c1_25, %c2_26] : memref<1x1x4x18x18xbf16, #tpu.memory_space<vmem>>, vector<1x1x4x16x16xbf16>
    %16 = vector.shape_cast %15 : vector<1x1x4x16x16xbf16> to vector<4x16x16xbf16>
    %17 = vector.shape_cast %16 : vector<4x16x16xbf16> to vector<4x256xbf16>
    %c0_27 = arith.constant 0 : index
    %c0_28 = arith.constant 0 : index
    %c0_29 = arith.constant 0 : index
    %c2_30 = arith.constant 2 : index
    %c0_31 = arith.constant 0 : index
    %18 = vector.load %arg4[%c0_27, %c0_28, %c0_29, %c2_30, %c0_31] : memref<1x1x4x18x18xbf16, #tpu.memory_space<vmem>>, vector<1x1x4x16x16xbf16>
    %19 = vector.shape_cast %18 : vector<1x1x4x16x16xbf16> to vector<4x16x16xbf16>
    %20 = vector.shape_cast %19 : vector<4x16x16xbf16> to vector<4x256xbf16>
    %c0_32 = arith.constant 0 : index
    %c0_33 = arith.constant 0 : index
    %c0_34 = arith.constant 0 : index
    %c2_35 = arith.constant 2 : index
    %c1_36 = arith.constant 1 : index
    %21 = vector.load %arg4[%c0_32, %c0_33, %c0_34, %c2_35, %c1_36] : memref<1x1x4x18x18xbf16, #tpu.memory_space<vmem>>, vector<1x1x4x16x16xbf16>
    %22 = vector.shape_cast %21 : vector<1x1x4x16x16xbf16> to vector<4x16x16xbf16>
    %23 = vector.shape_cast %22 : vector<4x16x16xbf16> to vector<4x256xbf16>
    %c0_37 = arith.constant 0 : index
    %c0_38 = arith.constant 0 : index
    %c0_39 = arith.constant 0 : index
    %c2_40 = arith.constant 2 : index
    %c2_41 = arith.constant 2 : index
    %24 = vector.load %arg4[%c0_37, %c0_38, %c0_39, %c2_40, %c2_41] : memref<1x1x4x18x18xbf16, #tpu.memory_space<vmem>>, vector<1x1x4x16x16xbf16>
    %25 = vector.shape_cast %24 : vector<1x1x4x16x16xbf16> to vector<4x16x16xbf16>
    %26 = vector.shape_cast %25 : vector<4x16x16xbf16> to vector<4x256xbf16>
    %27 = tpu.concatenate %2, %5, %8, %11, %14, %17, %20, %23, %26 in 0 : vector<4x256xbf16>, vector<4x256xbf16>, vector<4x256xbf16>, vector<4x256xbf16>, vector<4x256xbf16>, vector<4x256xbf16>, vector<4x256xbf16>, vector<4x256xbf16>, vector<4x256xbf16> -> vector<36x256xbf16>
    %c0_42 = arith.constant 0 : index
    %c0_43 = arith.constant 0 : index
    %28 = vector.load %arg2[%c0_42, %c0_43] : memref<16x36xbf16, #tpu.memory_space<vmem>>, vector<16x36xbf16>
    %cst = arith.constant dense<0.000000e+00> : vector<16x256xf32>
    %29 = tpu.matmul %28, %27, %cst {dimension_numbers = #tpu.dot_dimension_numbers<[1], [0], [0], [1], [0, 0, 1, 1], [], []>} : vector<16x36xbf16>, vector<36x256xbf16>, vector<16x256xf32> -> vector<16x256xf32>
    %c0_44 = arith.constant 0 : index
    %c0_45 = arith.constant 0 : index
    %30 = vector.load %arg3[%c0_44, %c0_45] : memref<16x1xf32, #tpu.memory_space<vmem>>, vector<16x1xf32>
    %31 = vector.broadcast %30 : vector<16x1xf32> to vector<16x256xf32>
    %32 = arith.addf %29, %31 : vector<16x256xf32>
    %cst_46 = arith.constant 0.000000e+00 : f32
    %33 = vector.broadcast %cst_46 : f32 to vector<16x256xf32>
    %34 = arith.subf %33, %32 : vector<16x256xf32>
    %35 = math.exp %34 : vector<16x256xf32>
    %cst_47 = arith.constant 1.000000e+00 : f32
    %36 = vector.broadcast %cst_47 : f32 to vector<16x256xf32>
    %37 = arith.addf %36, %35 : vector<16x256xf32>
    %38 = tpu.reciprocal %37 {approx = true} : vector<16x256xf32> -> vector<16x256xf32>
    %39 = arith.mulf %32, %38 : vector<16x256xf32>
    %40 = arith.truncf %39 : vector<16x256xf32> to vector<16x256xbf16>
    %c0_48 = arith.constant 0 : index
    %c0_49 = arith.constant 0 : index
    %c0_50 = arith.constant 0 : index
    %41 = vector.load %arg5[%c0_48, %c0_49, %c0_50] : memref<1x16x256xbf16, #tpu.memory_space<vmem>>, vector<1x16x256xbf16>
    %42 = vector.shape_cast %41 : vector<1x16x256xbf16> to vector<16x256xbf16>
    %43 = vector.shape_cast %40 : vector<16x256xbf16> to vector<1x16x256xbf16>
    tpu.vector_store %arg5[%c0_48, %c0_49, %c0_50], %43 {strides = array<i32>} : memref<1x16x256xbf16, #tpu.memory_space<vmem>>, vector<1x16x256xbf16>,
    return
  }
  func.func @transform_0(%arg0: i32, %arg1: i32) -> (i32, i32) {
    %c0_i32 = arith.constant 0 : i32
    %c0_i32_0 = arith.constant 0 : i32
    %c0_i32_1 = arith.constant 0 : i32
    return %c0_i32, %c0_i32_0 : i32, i32
  }
  func.func @transform_1(%arg0: i32, %arg1: i32) -> (i32, i32) {
    %c0_i32 = arith.constant 0 : i32
    %c0_i32_0 = arith.constant 0 : i32
    %c0_i32_1 = arith.constant 0 : i32
    return %c0_i32, %c0_i32_0 : i32, i32
  }
  func.func @transform_2(%arg0: i32, %arg1: i32) -> (i32, i32, i32, i32, i32) {
    %c0_i32 = arith.constant 0 : i32
    %c0_i32_0 = arith.constant 0 : i32
    %c0_i32_1 = arith.constant 0 : i32
    %c0_i32_2 = arith.constant 0 : i32
    return %arg0, %arg1, %c0_i32, %c0_i32_0, %c0_i32_1 : i32, i32, i32, i32, i32
  }
  func.func @transform_3(%arg0: i32, %arg1: i32) -> (i32, i32, i32) {
    %c0_i32 = arith.constant 0 : i32
    %c0_i32_0 = arith.constant 0 : i32
    return %arg0, %c0_i32, %arg1 : i32, i32, i32
  }
}

</mosaic_0001>

<llo_original>
// kernel: upsample_block.1
$region0: #{upsample_block.1}
  #allocation0 [shape = 'u32[]', space=smem, size = 0x4, offset = 0x4, fixed_abs, tag = 'smem constant byte address 0x4 - core index']
  #allocation1 [shape = 'u32[144,128]{1,0:T(1,128)}', space=vmem, size = 0x12000, scoped, tag = 'internal scratch']
  %s0 = inlined_call_operand.vmem [shape: bf16[16,36], index: 0, kind: input, shape index: {}]
  %s1 = inlined_call_operand.vmem [shape: f32[16,1], index: 1, kind: input, shape index: {}]
  %s2 = inlined_call_operand.vmem [shape: bf16[2,1,4,18,18], index: 2, kind: input, shape index: {}]
  %s3 = inlined_call_operand.vmem [shape: bf16[2,16,256], index: 3, kind: output, shape index: {}]
  %s4 = sld [smem:[#allocation0]]
  $region45: #{upsample_block.1} parent=0
    _
  %s6 = ssub.s32 1, %s4
  %s7 = scalar_select 0, %s6, %s4
  loop: start=0, step=1, limit=4
  $region2: #{upsample_block.1} parent=0 // loop_pre_header
    _
  $region3: #{upsample_block.1} parent=0 // loop_header
    %s9 = sphi 0, %s13
    %p10 = scmp.ge.s32.totalorder %s9, 4
    %s16 = sphi 0, %s28
    %s17 = sphi 0, %s24
    %s18 = sphi 0, %s16
    %s19 = sphi 0, %s17
    %s20 = sphi 0, %s18
    %s21 = sphi 0, %s19
    %s29 = sphi 0, %s29
    %s31 = sphi 0, %s29
    %s32 = sphi 0, %s31
    %s46 = sphi 0, %s32
    %s50 = sphi 0, %s50
    %s52 = sphi 0, %s50
    %s53 = sphi 0, %s52
    %s67 = sphi 0, %s53
    %s75 = sphi 0, %s77
    %s78 = sphi 0, %s75
    %s79 = sphi 0, %s78
    %s95 = sphi 0, %s79
    %s103 = sphi 0, %s105
    %s106 = sphi 0, %s103
    %s107 = sphi 0, %s106
    %s123 = sphi 0, %s107
  $region4: #{upsample_block.1} parent=0 // loop_header_branch
    %12 = sbr.rel (%p10) target = $region8
  $region5: #{upsample_block.1} parent=0 // loop_body
    %s14 = ssub.s32 %s9, 1
    %s15 = ssub.s32 %s9, 2
    %s22 = sadd.s32 1, %s17
    %p23 = scmp.ge.s32.totalorder %s22, 1
    %s24 = scalar_select %p23, 0, %s22
    %s25 = sadd.s32 1, %s16
    %s26 = scalar_select %p23, %s25, %s16
    %p27 = scmp.ge.s32.totalorder %s26, 2
    %s28 = scalar_select %p27, 0, %s26
    %s30 = sadd.s32 %s29, 1
    %p33 = scmp.eq.s32.totalorder %s9, 1
    %p34 = scmp.ne.s32.totalorder %s29, %s31
    %p35 = scmp.eq.s32.totalorder %s9, 0
    %p36 = por %p34, %p35
    %p37 = scmp.ne.s32.totalorder %s29, %s31
    %p38 = scmp.eq.s32.totalorder %s14, 1
    %p39 = por %p37, %p38
    %p40 = scmp.ne.s32.totalorder %s31, %s32
    %p41 = scmp.eq.s32.totalorder %s14, 0
    %p42 = por %p40, %p41
    %p43 = scmp.ne.s32.totalorder %s31, %s32
    %p44 = scmp.eq.s32.totalorder %s15, 1
    %p45 = por %p43, %p44
    %p47 = scmp.ne.s32.totalorder %s32, %s46
    %p48 = scmp.eq.s32.totalorder %s15, 0
    %p49 = por %p47, %p48
    %s51 = sadd.s32 %s50, 1
    %p54 = scmp.eq.s32.totalorder %s9, 1
    %p55 = scmp.ne.s32.totalorder %s50, %s52
    %p56 = scmp.eq.s32.totalorder %s9, 0
    %p57 = por %p55, %p56
    %p58 = scmp.ne.s32.totalorder %s50, %s52
    %p59 = scmp.eq.s32.totalorder %s14, 1
    %p60 = por %p58, %p59
    %p61 = scmp.ne.s32.totalorder %s52, %s53
    %p62 = scmp.eq.s32.totalorder %s14, 0
    %p63 = por %p61, %p62
    %p64 = scmp.ne.s32.totalorder %s52, %s53
    %p65 = scmp.eq.s32.totalorder %s15, 1
    %p66 = por %p64, %p65
    %p68 = scmp.ne.s32.totalorder %s53, %s67
    %p69 = scmp.eq.s32.totalorder %s15, 0
    %p70 = por %p68, %p69
    %s71 = ssub.s32 %s16, %s28
    %s72 = ssub.s32 %s17, %s24
    %s73 = sor.u32 %s71, %s72
    %p74 = scmp.eq.s32.totalorder %s73, 0
    %s76 = sadd.s32 %s75, 1
    %s77 = scalar_select %p74, %s75, %s76
    %p80 = pneg %p74
    %p81 = scmp.eq.s32.totalorder %s9, 1
    %p82 = por %p80, %p81
    %p83 = scmp.ne.s32.totalorder %s75, %s78
    %p84 = scmp.eq.s32.totalorder %s9, 0
    %p85 = por %p83, %p84
    %p86 = scmp.ne.s32.totalorder %s75, %s78
    %p87 = scmp.eq.s32.totalorder %s14, 1
    %p88 = por %p86, %p87
    %p89 = scmp.ne.s32.totalorder %s78, %s79
    %p90 = scmp.eq.s32.totalorder %s14, 0
    %p91 = por %p89, %p90
    %p92 = scmp.ne.s32.totalorder %s78, %s79
    %p93 = scmp.eq.s32.totalorder %s15, 1
    %p94 = por %p92, %p93
    %p96 = scmp.ne.s32.totalorder %s79, %s95
    %p97 = scmp.eq.s32.totalorder %s15, 0
    %p98 = por %p96, %p97
    %s99 = ssub.s32 %s16, %s28
    %s100 = ssub.s32 %s17, %s24
    %s101 = sor.u32 %s99, %s100
    %p102 = scmp.eq.s32.totalorder %s101, 0
    %s104 = sadd.s32 %s103, 1
    %s105 = scalar_select %p102, %s103, %s104
    %p108 = pneg %p102
    %p109 = scmp.eq.s32.totalorder %s9, 1
    %p110 = por %p108, %p109
    %p111 = scmp.ne.s32.totalorder %s103, %s106
    %p112 = scmp.eq.s32.totalorder %s9, 0
    %p113 = por %p111, %p112
    %p114 = scmp.ne.s32.totalorder %s103, %s106
    %p115 = scmp.eq.s32.totalorder %s14, 1
    %p116 = por %p114, %p115
    %p117 = scmp.ne.s32.totalorder %s106, %s107
    %p118 = scmp.eq.s32.totalorder %s14, 0
    %p119 = por %p117, %p118
    %p120 = scmp.ne.s32.totalorder %s106, %s107
    %p121 = scmp.eq.s32.totalorder %s15, 1
    %p122 = por %p120, %p121
    %p124 = scmp.ne.s32.totalorder %s107, %s123
    %p125 = scmp.eq.s32.totalorder %s15, 0
    %p126 = por %p124, %p125
    %p127 = scmp.le.s32.totalorder 1, %s9
    %p128 = scmp.lt.s32.totalorder %s9, 3
    %p129 = pnand %p127, %p128
    %p130 = pneg %p129
    // Predicated region
    $region9: #{upsample_block.1} parent=5 // pred_check
      _
    $region10: #{upsample_block.1} parent=5 // pred_check_branch
      %132 = sbr.rel (%p129) target = $region12
    $region11: #{upsample_block.1} parent=5 // pred_region
      %s133 = ssub.s32 %s9, 1
      // Predicated region
      $region13: #{upsample_block.1} parent=11 // pred_check
        %p134 = pneg %p42
      $region14: #{upsample_block.1} parent=11 // pred_check_branch
        %136 = sbr.rel (%p134) target = $region16
      $region15: #{upsample_block.1} parent=11 // pred_region
        _
      $region16: #{upsample_block.1} parent=11 // pred_fallthru
        _
      // Predicated region
      $region17: #{upsample_block.1} parent=11 // pred_check
        %p137 = pneg %p63
      $region18: #{upsample_block.1} parent=11 // pred_check_branch
        %139 = sbr.rel (%p137) target = $region20
      $region19: #{upsample_block.1} parent=11 // pred_region
        _
      $region20: #{upsample_block.1} parent=11 // pred_fallthru
        _
    $region12: #{upsample_block.1} parent=5 // pred_fallthru
      _
    %p140 = scmp.lt.s32.totalorder %s9, 2
    // Predicated region
    $region21: #{upsample_block.1} parent=5 // pred_check
      %p141 = pneg %p140
    $region22: #{upsample_block.1} parent=5 // pred_check_branch
      %143 = sbr.rel (%p141) target = $region24
    $region23: #{upsample_block.1} parent=5 // pred_region
      // Predicated region
      $region25: #{upsample_block.1} parent=23 // pred_check
        %p144 = pneg %p85
      $region26: #{upsample_block.1} parent=23 // pred_check_branch
        %146 = sbr.rel (%p144) target = $region28
      $region27: #{upsample_block.1} parent=23 // pred_region
        %p147 = scmp.lt.s32.totalorder %s16, 1
        %s148 = scalar_select %p147, %s16, 1
        %p149 = scmp.lt.s32.totalorder %s17, 0
        %s150 = scalar_select %p149, %s17, 0
        %s151 = smul.addr %s150, 12
        %s152 = smul.addr %s148, 12
        %s153 = sadd.s32 %s151, %s152
        %s154 = smul.addr %s153, 4
        %s155 = scalar_lea.vmem %s2, %s154
      $region28: #{upsample_block.1} parent=23 // pred_fallthru
        _
    $region24: #{upsample_block.1} parent=5 // pred_fallthru
      _
    %p156 = scmp.le.s32.totalorder 1, %s9
    %p157 = scmp.lt.s32.totalorder %s9, 3
    %p158 = pnand %p156, %p157
    %p159 = pneg %p158
    // Predicated region
    $region29: #{upsample_block.1} parent=5 // pred_check
      _
    $region30: #{upsample_block.1} parent=5 // pred_check_branch
      %161 = sbr.rel (%p158) target = $region32
    $region31: #{upsample_block.1} parent=5 // pred_region
      %s162 = ssub.s32 %s9, 1
      %p163 = pneg %p42
      %p164 = pneg %p39
      %p165 = pneg %p63
      %p166 = pneg %p60
      %p167 = scmp.lt.s32.totalorder %s18, 1
      %s168 = scalar_select %p167, %s18, 1
      %p169 = scmp.lt.s32.totalorder %s19, 0
      %s170 = scalar_select %p169, %s19, 0
      %s171 = smul.addr %s170, 12
      %s172 = smul.addr %s168, 12
      %s173 = sadd.s32 %s171, %s172
      %s174 = smul.addr %s173, 4
      %s175 = scalar_lea.vmem %s2, %s174
      %p176 = pneg %p91
      %p177 = pneg %p88
      %p178 = pneg %p119
      %p179 = pneg %p116
      %s180 = smul.u32 2, %s19
      %p181 = scmp.lt.s32.totalorder %s18, 1
      %s182 = scalar_select %p181, %s18, 1
      %p183 = scmp.lt.s32.totalorder %s180, 1
      %s184 = scalar_select %p183, %s180, 1
      %s185 = smul.addr %s182, 4
      %s186 = sadd.s32 %s184, %s185
      %s187 = smul.addr %s186, 4
      %s188 = scalar_lea.vmem %s3, %s187
      %p189 = scmp.lt.s32.totalorder %s18, 1
      %s190 = scalar_select %p189, %s18, 1
      %p191 = scmp.lt.s32.totalorder %s19, 0
      %s192 = scalar_select %p191, %s19, 0
      %s193 = smul.addr %s192, 12
      %s194 = smul.addr %s190, 12
      %s195 = sadd.s32 %s193, %s194
      %s196 = smul.addr %s195, 4
      %s197 = scalar_lea.vmem %s2, %s196
      %s198 = smul.u32 2, %s19
      %p199 = scmp.lt.s32.totalorder %s18, 1
      %s200 = scalar_select %p199, %s18, 1
      %p201 = scmp.lt.s32.totalorder %s198, 1
      %s202 = scalar_select %p201, %s198, 1
      %s203 = smul.addr %s200, 4
      %s204 = sadd.s32 %s202, %s203
      %s205 = smul.addr %s204, 4
      %s206 = scalar_lea.vmem %s3, %s205
      %s207 = smul.u32 2, %s19
      %v209 = vld [vmem:[%s197] sm:$0xf]
      %v210 = vld [vmem:[%s197 + $0x4] sm:$0xf]
      %v211 = vld [vmem:[%s197 + $0xc] sm:$0xf]
      %v212 = vld [vmem:[%s197 + $0x10] sm:$0xf]
      %v213 = vld [vmem:[%s197 + $0x18] sm:$0xf]
      %v214 = vld [vmem:[%s197 + $0x1c] sm:$0xf]
      %v215 = vld [vmem:[%s197 + $0x24] sm:$0xf]
      %v216 = vld [vmem:[%s197 + $0x28] sm:$0xf]
      %v219 = vpack.i.b16 %v211, %v209
      %v220 = vshrl.u32 %v209, 16
      %v221 = vshrl.u32 %v211, 16
      %v222 = vpack.i.b16 %v221, %v220
      %v225 = vpack.i.b16 %v215, %v213
      %v226 = vshrl.u32 %v213, 16
      %v227 = vshrl.u32 %v215, 16
      %v228 = vpack.i.b16 %v227, %v226
      %v231 = vpack.i.b16 %v212, %v210
      %v232 = vshrl.u32 %v210, 16
      %v233 = vshrl.u32 %v212, 16
      %v234 = vpack.i.b16 %v233, %v232
      %v237 = vpack.i.b16 %v216, %v214
      %v238 = vshrl.u32 %v214, 16
      %v239 = vshrl.u32 %v216, 16
      %v240 = vpack.i.b16 %v239, %v238
      %v243 = vunpack.c.l.s4 1983009808
      %v244 = vunpack.c.0.s8 %v243
      %v245 = vlaneseq
      %v246 = vshrl.u32 %v245, 7
      %v247 = vsub.s32 %v244, %v246
      %v248 = vrot.slane %v219, %v247
      %v251 = vunpack.c.l.s4 1983009808
      %v252 = vunpack.c.0.s8 %v251
      %v253 = vlaneseq
      %v254 = vshrl.u32 %v253, 7
      %v255 = vsub.s32 %v252, %v254
      %v256 = vrot.slane %v225, %v255
      %v257 = vcombine.low %v248, %v256
      %v258 = vcombine.high %v248, %v256
      %v260 = vunpack.c.l.s4 1934713408
      %v261 = vunpack.c.0.s8 %v260
      %v262 = vlaneseq
      %v263 = vshrl.u32 %v262, 7
      %v264 = vsub.s32 %v261, %v263
      %v265 = vrot.slane %v257, %v264
      %v267 = vunpack.c.l.s4 1934713408
      %v268 = vunpack.c.0.s8 %v267
      %v269 = vlaneseq
      %v270 = vshrl.u32 %v269, 7
      %v271 = vsub.s32 %v268, %v270
      %v272 = vrot.slane %v258, %v271
      %v273 = vcombine.high %v265, 0
      %v274 = vcombine.high %v272, 0
      %v277 = vunpack.c.l.s4 1983009808
      %v278 = vunpack.c.0.s8 %v277
      %v279 = vlaneseq
      %v280 = vshrl.u32 %v279, 7
      %v281 = vsub.s32 %v278, %v280
      %v282 = vrot.slane %v222, %v281
      %v285 = vunpack.c.l.s4 1983009808
      %v286 = vunpack.c.0.s8 %v285
      %v287 = vlaneseq
      %v288 = vshrl.u32 %v287, 7
      %v289 = vsub.s32 %v286, %v288
      %v290 = vrot.slane %v228, %v289
      %v291 = vcombine.low %v282, %v290
      %v292 = vcombine.high %v282, %v290
      %v294 = vunpack.c.l.s4 1934713408
      %v295 = vunpack.c.0.s8 %v294
      %v296 = vlaneseq
      %v297 = vshrl.u32 %v296, 7
      %v298 = vsub.s32 %v295, %v297
      %v299 = vrot.slane %v291, %v298
      %v301 = vunpack.c.l.s4 1934713408
      %v302 = vunpack.c.0.s8 %v301
      %v303 = vlaneseq
      %v304 = vshrl.u32 %v303, 7
      %v305 = vsub.s32 %v302, %v304
      %v306 = vrot.slane %v292, %v305
      %v307 = vcombine.high %v299, 0
      %v308 = vcombine.high %v306, 0
      %v311 = vunpack.c.l.s4 1983009808
      %v312 = vunpack.c.0.s8 %v311
      %v313 = vlaneseq
      %v314 = vshrl.u32 %v313, 7
      %v315 = vsub.s32 %v312, %v314
      %v316 = vrot.slane %v231, %v315
      %v319 = vunpack.c.l.s4 1983009808
      %v320 = vunpack.c.0.s8 %v319
      %v321 = vlaneseq
      %v322 = vshrl.u32 %v321, 7
      %v323 = vsub.s32 %v320, %v322
      %v324 = vrot.slane %v237, %v323
      %v325 = vcombine.low %v316, %v324
      %v326 = vcombine.high %v316, %v324
      %v328 = vunpack.c.l.s4 1934713408
      %v329 = vunpack.c.0.s8 %v328
      %v330 = vlaneseq
      %v331 = vshrl.u32 %v330, 7
      %v332 = vsub.s32 %v329, %v331
      %v333 = vrot.slane %v325, %v332
      %v335 = vunpack.c.l.s4 1934713408
      %v336 = vunpack.c.0.s8 %v335
      %v337 = vlaneseq
      %v338 = vshrl.u32 %v337, 7
      %v339 = vsub.s32 %v336, %v338
      %v340 = vrot.slane %v326, %v339
      %v341 = vcombine.high %v333, 0
      %v342 = vcombine.high %v340, 0
      %v345 = vunpack.c.l.s4 1983009808
      %v346 = vunpack.c.0.s8 %v345
      %v347 = vlaneseq
      %v348 = vshrl.u32 %v347, 7
      %v349 = vsub.s32 %v346, %v348
      %v350 = vrot.slane %v234, %v349
      %v353 = vunpack.c.l.s4 1983009808
      %v354 = vunpack.c.0.s8 %v353
      %v355 = vlaneseq
      %v356 = vshrl.u32 %v355, 7
      %v357 = vsub.s32 %v354, %v356
      %v358 = vrot.slane %v240, %v357
      %v359 = vcombine.low %v350, %v358
      %v360 = vcombine.high %v350, %v358
      %v362 = vunpack.c.l.s4 1934713408
      %v363 = vunpack.c.0.s8 %v362
      %v364 = vlaneseq
      %v365 = vshrl.u32 %v364, 7
      %v366 = vsub.s32 %v363, %v365
      %v367 = vrot.slane %v359, %v366
      %v369 = vunpack.c.l.s4 1934713408
      %v370 = vunpack.c.0.s8 %v369
      %v371 = vlaneseq
      %v372 = vshrl.u32 %v371, 7
      %v373 = vsub.s32 %v370, %v372
      %v374 = vrot.slane %v360, %v373
      %v375 = vcombine.high %v367, 0
      %v376 = vcombine.high %v374, 0
      %v378 = vunpack.c.l.b16 %v299
      %v379 = vpack.c.b16 %v378, %v378
      %380 = vrot.lane.b32.xlu0 %v379, 16
      %v381 = vpop.permute.xlu0 %380
      %v383 = vunpack.c.l.b16 %v273
      %v384 = vpack.c.b16 %v383, %v383
      %385 = vrot.lane.b32.xlu0 %v384, 32
      %v386 = vpop.permute.xlu0 %385
      %v388 = vunpack.c.l.b16 %v307
      %v389 = vpack.c.b16 %v388, %v388
      %390 = vrot.lane.b32.xlu0 %v389, 48
      %v391 = vpop.permute.xlu0 %390
      %v393 = vunpack.c.l.b16 %v272
      %v394 = vpack.c.b16 %v393, %v393
      %395 = vrot.lane.b32.xlu0 %v394, 64
      %v396 = vpop.permute.xlu0 %395
      %v398 = vunpack.c.l.b16 %v306
      %v399 = vpack.c.b16 %v398, %v398
      %400 = vrot.lane.b32.xlu0 %v399, 80
      %v401 = vpop.permute.xlu0 %400
      %v403 = vunpack.c.l.b16 %v274
      %v404 = vpack.c.b16 %v403, %v403
      %405 = vrot.lane.b32.xlu0 %v404, 96
      %v406 = vpop.permute.xlu0 %405
      %v408 = vunpack.c.l.b16 %v308
      %v409 = vpack.c.b16 %v408, %v408
      %410 = vrot.lane.b32.xlu0 %v409, 112
      %v411 = vpop.permute.xlu0 %410
      %v413 = vunpack.c.l.b16 %v367
      %v414 = vpack.c.b16 %v413, %v413
      %415 = vrot.lane.b32.xlu0 %v414, 16
      %v416 = vpop.permute.xlu0 %415
      %v418 = vunpack.c.l.b16 %v341
      %v419 = vpack.c.b16 %v418, %v418
      %420 = vrot.lane.b32.xlu0 %v419, 32
      %v421 = vpop.permute.xlu0 %420
      %v423 = vunpack.c.l.b16 %v375
      %v424 = vpack.c.b16 %v423, %v423
      %425 = vrot.lane.b32.xlu0 %v424, 48
      %v426 = vpop.permute.xlu0 %425
      %v428 = vunpack.c.l.b16 %v340
      %v429 = vpack.c.b16 %v428, %v428
      %430 = vrot.lane.b32.xlu0 %v429, 64
      %v431 = vpop.permute.xlu0 %430
      %v433 = vunpack.c.l.b16 %v374
      %v434 = vpack.c.b16 %v433, %v433
      %435 = vrot.lane.b32.xlu0 %v434, 80
      %v436 = vpop.permute.xlu0 %435
      %v438 = vunpack.c.l.b16 %v342
      %v439 = vpack.c.b16 %v438, %v438
      %440 = vrot.lane.b32.xlu0 %v439, 96
      %v441 = vpop.permute.xlu0 %440
      %v443 = vunpack.c.l.b16 %v376
      %v444 = vpack.c.b16 %v443, %v443
      %445 = vrot.lane.b32.xlu0 %v444, 112
      %v446 = vpop.permute.xlu0 %445
      %vm447 = vcmask 130048
      %v450 = vsel %vm447, %v265, %v381
      %vm451 = vcmask 261120
      %v453 = vsel %vm451, %v450, %v386
      %vm454 = vcmask 392192
      %v456 = vsel %vm454, %v453, %v391
      %vm457 = vcmask 523264
      %v459 = vsel %vm457, %v456, %v396
      %vm460 = vcmask 654336
      %v462 = vsel %vm460, %v459, %v401
      %vm463 = vcmask 785408
      %v465 = vsel %vm463, %v462, %v406
      %vm466 = vcmask 916480
      %v468 = vsel %vm466, %v465, %v411
      %v471 = vsel %vm447, %v333, %v416
      %v473 = vsel %vm451, %v471, %v421
      %v475 = vsel %vm454, %v473, %v426
      %v477 = vsel %vm457, %v475, %v431
      %v479 = vsel %vm460, %v477, %v436
      %v481 = vsel %vm463, %v479, %v441
      %v483 = vsel %vm466, %v481, %v446
      %492 = vrot.lane.b32.xlu0 %v209, 127
      %v493 = vpop.permute.xlu0 %492
      %494 = vrot.lane.b32.xlu0 %v210, 127
      %v495 = vpop.permute.xlu0 %494
      %496 = vrot.lane.b32.xlu0 %v211, 127
      %v497 = vpop.permute.xlu0 %496
      %498 = vrot.lane.b32.xlu0 %v212, 127
      %v499 = vpop.permute.xlu0 %498
      %500 = vrot.lane.b32.xlu0 %v213, 127
      %v501 = vpop.permute.xlu0 %500
      %502 = vrot.lane.b32.xlu0 %v214, 127
      %v503 = vpop.permute.xlu0 %502
      %504 = vrot.lane.b32.xlu0 %v215, 127
      %v505 = vpop.permute.xlu0 %504
      %506 = vrot.lane.b32.xlu0 %v216, 127
      %v507 = vpop.permute.xlu0 %506
      %v510 = vpack.i.b16 %v497, %v493
      %v511 = vshrl.u32 %v493, 16
      %v512 = vshrl.u32 %v497, 16
      %v513 = vpack.i.b16 %v512, %v511
      %v516 = vpack.i.b16 %v505, %v501
      %v517 = vshrl.u32 %v501, 16
      %v518 = vshrl.u32 %v505, 16
      %v519 = vpack.i.b16 %v518, %v517
      %v522 = vpack.i.b16 %v499, %v495
      %v523 = vshrl.u32 %v495, 16
      %v524 = vshrl.u32 %v499, 16
      %v525 = vpack.i.b16 %v524, %v523
      %v528 = vpack.i.b16 %v507, %v503
      %v529 = vshrl.u32 %v503, 16
      %v530 = vshrl.u32 %v507, 16
      %v531 = vpack.i.b16 %v530, %v529
      %v534 = vunpack.c.l.s4 1983009808
      %v535 = vunpack.c.0.s8 %v534
      %v536 = vlaneseq
      %v537 = vshrl.u32 %v536, 7
      %v538 = vsub.s32 %v535, %v537
      %v539 = vrot.slane %v510, %v538
      %v542 = vunpack.c.l.s4 1983009808
      %v543 = vunpack.c.0.s8 %v542
      %v544 = vlaneseq
      %v545 = vshrl.u32 %v544, 7
      %v546 = vsub.s32 %v543, %v545
      %v547 = vrot.slane %v516, %v546
      %v548 = vcombine.low %v539, %v547
      %v549 = vcombine.high %v539, %v547
      %v551 = vunpack.c.l.s4 1934713408
      %v552 = vunpack.c.0.s8 %v551
      %v553 = vlaneseq
      %v554 = vshrl.u32 %v553, 7
      %v555 = vsub.s32 %v552, %v554
      %v556 = vrot.slane %v548, %v555
      %v558 = vunpack.c.l.s4 1934713408
      %v559 = vunpack.c.0.s8 %v558
      %v560 = vlaneseq
      %v561 = vshrl.u32 %v560, 7
      %v562 = vsub.s32 %v559, %v561
      %v563 = vrot.slane %v549, %v562
      %v564 = vcombine.high %v556, 0
      %v565 = vcombine.high %v563, 0
      %v568 = vunpack.c.l.s4 1983009808
      %v569 = vunpack.c.0.s8 %v568
      %v570 = vlaneseq
      %v571 = vshrl.u32 %v570, 7
      %v572 = vsub.s32 %v569, %v571
      %v573 = vrot.slane %v513, %v572
      %v576 = vunpack.c.l.s4 1983009808
      %v577 = vunpack.c.0.s8 %v576
      %v578 = vlaneseq
      %v579 = vshrl.u32 %v578, 7
      %v580 = vsub.s32 %v577, %v579
      %v581 = vrot.slane %v519, %v580
      %v582 = vcombine.low %v573, %v581
      %v583 = vcombine.high %v573, %v581
      %v585 = vunpack.c.l.s4 1934713408
      %v586 = vunpack.c.0.s8 %v585
      %v587 = vlaneseq
      %v588 = vshrl.u32 %v587, 7
      %v589 = vsub.s32 %v586, %v588
      %v590 = vrot.slane %v582, %v589
      %v592 = vunpack.c.l.s4 1934713408
      %v593 = vunpack.c.0.s8 %v592
      %v594 = vlaneseq
      %v595 = vshrl.u32 %v594, 7
      %v596 = vsub.s32 %v593, %v595
      %v597 = vrot.slane %v583, %v596
      %v598 = vcombine.high %v590, 0
      %v599 = vcombine.high %v597, 0
      %v602 = vunpack.c.l.s4 1983009808
      %v603 = vunpack.c.0.s8 %v602
      %v604 = vlaneseq
      %v605 = vshrl.u32 %v604, 7
      %v606 = vsub.s32 %v603, %v605
      %v607 = vrot.slane %v522, %v606
      %v610 = vunpack.c.l.s4 1983009808
      %v611 = vunpack.c.0.s8 %v610
      %v612 = vlaneseq
      %v613 = vshrl.u32 %v612, 7
      %v614 = vsub.s32 %v611, %v613
      %v615 = vrot.slane %v528, %v614
      %v616 = vcombine.low %v607, %v615
      %v617 = vcombine.high %v607, %v615
      %v619 = vunpack.c.l.s4 1934713408
      %v620 = vunpack.c.0.s8 %v619
      %v621 = vlaneseq
      %v622 = vshrl.u32 %v621, 7
      %v623 = vsub.s32 %v620, %v622
      %v624 = vrot.slane %v616, %v623
      %v626 = vunpack.c.l.s4 1934713408
      %v627 = vunpack.c.0.s8 %v626
      %v628 = vlaneseq
      %v629 = vshrl.u32 %v628, 7
      %v630 = vsub.s32 %v627, %v629
      %v631 = vrot.slane %v617, %v630
      %v632 = vcombine.high %v624, 0
      %v633 = vcombine.high %v631, 0
      %v636 = vunpack.c.l.s4 1983009808
      %v637 = vunpack.c.0.s8 %v636
      %v638 = vlaneseq
      %v639 = vshrl.u32 %v638, 7
      %v640 = vsub.s32 %v637, %v639
      %v641 = vrot.slane %v525, %v640
      %v644 = vunpack.c.l.s4 1983009808
      %v645 = vunpack.c.0.s8 %v644
      %v646 = vlaneseq
      %v647 = vshrl.u32 %v646, 7
      %v648 = vsub.s32 %v645, %v647
      %v649 = vrot.slane %v531, %v648
      %v650 = vcombine.low %v641, %v649
      %v651 = vcombine.high %v641, %v649
      %v653 = vunpack.c.l.s4 1934713408
      %v654 = vunpack.c.0.s8 %v653
      %v655 = vlaneseq
      %v656 = vshrl.u32 %v655, 7
      %v657 = vsub.s32 %v654, %v656
      %v658 = vrot.slane %v650, %v657
      %v660 = vunpack.c.l.s4 1934713408
      %v661 = vunpack.c.0.s8 %v660
      %v662 = vlaneseq
      %v663 = vshrl.u32 %v662, 7
      %v664 = vsub.s32 %v661, %v663
      %v665 = vrot.slane %v651, %v664
      %v666 = vcombine.high %v658, 0
      %v667 = vcombine.high %v665, 0
      %v669 = vunpack.c.l.b16 %v590
      %v670 = vpack.c.b16 %v669, %v669
      %671 = vrot.lane.b32.xlu0 %v670, 16
      %v672 = vpop.permute.xlu0 %671
      %v674 = vunpack.c.l.b16 %v564
      %v675 = vpack.c.b16 %v674, %v674
      %676 = vrot.lane.b32.xlu0 %v675, 32
      %v677 = vpop.permute.xlu0 %676
      %v679 = vunpack.c.l.b16 %v598
      %v680 = vpack.c.b16 %v679, %v679
      %681 = vrot.lane.b32.xlu0 %v680, 48
      %v682 = vpop.permute.xlu0 %681
      %v684 = vunpack.c.l.b16 %v563
      %v685 = vpack.c.b16 %v684, %v684
      %686 = vrot.lane.b32.xlu0 %v685, 64
      %v687 = vpop.permute.xlu0 %686
      %v689 = vunpack.c.l.b16 %v597
      %v690 = vpack.c.b16 %v689, %v689
      %691 = vrot.lane.b32.xlu0 %v690, 80
      %v692 = vpop.permute.xlu0 %691
      %v694 = vunpack.c.l.b16 %v565
      %v695 = vpack.c.b16 %v694, %v694
      %696 = vrot.lane.b32.xlu0 %v695, 96
      %v697 = vpop.permute.xlu0 %696
      %v699 = vunpack.c.l.b16 %v599
      %v700 = vpack.c.b16 %v699, %v699
      %701 = vrot.lane.b32.xlu0 %v700, 112
      %v702 = vpop.permute.xlu0 %701
      %v704 = vunpack.c.l.b16 %v658
      %v705 = vpack.c.b16 %v704, %v704
      %706 = vrot.lane.b32.xlu0 %v705, 16
      %v707 = vpop.permute.xlu0 %706
      %v709 = vunpack.c.l.b16 %v632
      %v710 = vpack.c.b16 %v709, %v709
      %711 = vrot.lane.b32.xlu0 %v710, 32
      %v712 = vpop.permute.xlu0 %711
      %v714 = vunpack.c.l.b16 %v666
      %v715 = vpack.c.b16 %v714, %v714
      %716 = vrot.lane.b32.xlu0 %v715, 48
      %v717 = vpop.permute.xlu0 %716
      %v719 = vunpack.c.l.b16 %v631
      %v720 = vpack.c.b16 %v719, %v719
      %721 = vrot.lane.b32.xlu0 %v720, 64
      %v722 = vpop.permute.xlu0 %721
      %v724 = vunpack.c.l.b16 %v665
      %v725 = vpack.c.b16 %v724, %v724
      %726 = vrot.lane.b32.xlu0 %v725, 80
      %v727 = vpop.permute.xlu0 %726
      %v729 = vunpack.c.l.b16 %v633
      %v730 = vpack.c.b16 %v729, %v729
      %731 = vrot.lane.b32.xlu0 %v730, 96
      %v732 = vpop.permute.xlu0 %731
      %v734 = vunpack.c.l.b16 %v667
      %v735 = vpack.c.b16 %v734, %v734
      %736 = vrot.lane.b32.xlu0 %v735, 112
      %v737 = vpop.permute.xlu0 %736
      %v740 = vsel %vm447, %v556, %v672
      %v742 = vsel %vm451, %v740, %v677
      %v744 = vsel %vm454, %v742, %v682
      %v746 = vsel %vm457, %v744, %v687
      %v748 = vsel %vm460, %v746, %v692
      %v750 = vsel %vm463, %v748, %v697
      %v752 = vsel %vm466, %v750, %v702
      %v755 = vsel %vm447, %v624, %v707
      %v757 = vsel %vm451, %v755, %v712
      %v759 = vsel %vm454, %v757, %v717
      %v761 = vsel %vm457, %v759, %v722
      %v763 = vsel %vm460, %v761, %v727
      %v765 = vsel %vm463, %v763, %v732
      %v767 = vsel %vm466, %v765, %v737
      %768 = vrot.lane.b32.xlu0 %v209, 126
      %v769 = vpop.permute.xlu0 %768
      %770 = vrot.lane.b32.xlu0 %v210, 126
      %v771 = vpop.permute.xlu0 %770
      %772 = vrot.lane.b32.xlu0 %v211, 126
      %v773 = vpop.permute.xlu0 %772
      %774 = vrot.lane.b32.xlu0 %v212, 126
      %v775 = vpop.permute.xlu0 %774
      %776 = vrot.lane.b32.xlu0 %v213, 126
      %v777 = vpop.permute.xlu0 %776
      %778 = vrot.lane.b32.xlu0 %v214, 126
      %v779 = vpop.permute.xlu0 %778
      %780 = vrot.lane.b32.xlu0 %v215, 126
      %v781 = vpop.permute.xlu0 %780
      %782 = vrot.lane.b32.xlu0 %v216, 126
      %v783 = vpop.permute.xlu0 %782
      %v786 = vpack.i.b16 %v773, %v769
      %v787 = vshrl.u32 %v769, 16
      %v788 = vshrl.u32 %v773, 16
      %v789 = vpack.i.b16 %v788, %v787
      %v792 = vpack.i.b16 %v781, %v777
      %v793 = vshrl.u32 %v777, 16
      %v794 = vshrl.u32 %v781, 16
      %v795 = vpack.i.b16 %v794, %v793
      %v798 = vpack.i.b16 %v775, %v771
      %v799 = vshrl.u32 %v771, 16
      %v800 = vshrl.u32 %v775, 16
      %v801 = vpack.i.b16 %v800, %v799
      %v804 = vpack.i.b16 %v783, %v779
      %v805 = vshrl.u32 %v779, 16
      %v806 = vshrl.u32 %v783, 16
      %v807 = vpack.i.b16 %v806, %v805
      %v810 = vunpack.c.l.s4 1983009808
      %v811 = vunpack.c.0.s8 %v810
      %v812 = vlaneseq
      %v813 = vshrl.u32 %v812, 7
      %v814 = vsub.s32 %v811, %v813
      %v815 = vrot.slane %v786, %v814
      %v818 = vunpack.c.l.s4 1983009808
      %v819 = vunpack.c.0.s8 %v818
      %v820 = vlaneseq
      %v821 = vshrl.u32 %v820, 7
      %v822 = vsub.s32 %v819, %v821
      %v823 = vrot.slane %v792, %v822
      %v824 = vcombine.low %v815, %v823
      %v825 = vcombine.high %v815, %v823
      %v827 = vunpack.c.l.s4 1934713408
      %v828 = vunpack.c.0.s8 %v827
      %v829 = vlaneseq
      %v830 = vshrl.u32 %v829, 7
      %v831 = vsub.s32 %v828, %v830
      %v832 = vrot.slane %v824, %v831
      %v834 = vunpack.c.l.s4 1934713408
      %v835 = vunpack.c.0.s8 %v834
      %v836 = vlaneseq
      %v837 = vshrl.u32 %v836, 7
      %v838 = vsub.s32 %v835, %v837
      %v839 = vrot.slane %v825, %v838
      %v840 = vcombine.high %v832, 0
      %v841 = vcombine.high %v839, 0
      %v844 = vunpack.c.l.s4 1983009808
      %v845 = vunpack.c.0.s8 %v844
      %v846 = vlaneseq
      %v847 = vshrl.u32 %v846, 7
      %v848 = vsub.s32 %v845, %v847
      %v849 = vrot.slane %v789, %v848
      %v852 = vunpack.c.l.s4 1983009808
      %v853 = vunpack.c.0.s8 %v852
      %v854 = vlaneseq
      %v855 = vshrl.u32 %v854, 7
      %v856 = vsub.s32 %v853, %v855
      %v857 = vrot.slane %v795, %v856
      %v858 = vcombine.low %v849, %v857
      %v859 = vcombine.high %v849, %v857
      %v861 = vunpack.c.l.s4 1934713408
      %v862 = vunpack.c.0.s8 %v861
      %v863 = vlaneseq
      %v864 = vshrl.u32 %v863, 7
      %v865 = vsub.s32 %v862, %v864
      %v866 = vrot.slane %v858, %v865
      %v868 = vunpack.c.l.s4 1934713408
      %v869 = vunpack.c.0.s8 %v868
      %v870 = vlaneseq
      %v871 = vshrl.u32 %v870, 7
      %v872 = vsub.s32 %v869, %v871
      %v873 = vrot.slane %v859, %v872
      %v874 = vcombine.high %v866, 0
      %v875 = vcombine.high %v873, 0
      %v878 = vunpack.c.l.s4 1983009808
      %v879 = vunpack.c.0.s8 %v878
      %v880 = vlaneseq
      %v881 = vshrl.u32 %v880, 7
      %v882 = vsub.s32 %v879, %v881
      %v883 = vrot.slane %v798, %v882
      %v886 = vunpack.c.l.s4 1983009808
      %v887 = vunpack.c.0.s8 %v886
      %v888 = vlaneseq
      %v889 = vshrl.u32 %v888, 7
      %v890 = vsub.s32 %v887, %v889
      %v891 = vrot.slane %v804, %v890
      %v892 = vcombine.low %v883, %v891
      %v893 = vcombine.high %v883, %v891
      %v895 = vunpack.c.l.s4 1934713408
      %v896 = vunpack.c.0.s8 %v895
      %v897 = vlaneseq
      %v898 = vshrl.u32 %v897, 7
      %v899 = vsub.s32 %v896, %v898
      %v900 = vrot.slane %v892, %v899
      %v902 = vunpack.c.l.s4 1934713408
      %v903 = vunpack.c.0.s8 %v902
      %v904 = vlaneseq
      %v905 = vshrl.u32 %v904, 7
      %v906 = vsub.s32 %v903, %v905
      %v907 = vrot.slane %v893, %v906
      %v908 = vcombine.high %v900, 0
      %v909 = vcombine.high %v907, 0
      %v912 = vunpack.c.l.s4 1983009808
      %v913 = vunpack.c.0.s8 %v912
      %v914 = vlaneseq
      %v915 = vshrl.u32 %v914, 7
      %v916 = vsub.s32 %v913, %v915
      %v917 = vrot.slane %v801, %v916
      %v920 = vunpack.c.l.s4 1983009808
      %v921 = vunpack.c.0.s8 %v920
      %v922 = vlaneseq
      %v923 = vshrl.u32 %v922, 7
      %v924 = vsub.s32 %v921, %v923
      %v925 = vrot.slane %v807, %v924
      %v926 = vcombine.low %v917, %v925
      %v927 = vcombine.high %v917, %v925
      %v929 = vunpack.c.l.s4 1934713408
      %v930 = vunpack.c.0.s8 %v929
      %v931 = vlaneseq
      %v932 = vshrl.u32 %v931, 7
      %v933 = vsub.s32 %v930, %v932
      %v934 = vrot.slane %v926, %v933
      %v936 = vunpack.c.l.s4 1934713408
      %v937 = vunpack.c.0.s8 %v936
      %v938 = vlaneseq
      %v939 = vshrl.u32 %v938, 7
      %v940 = vsub.s32 %v937, %v939
      %v941 = vrot.slane %v927, %v940
      %v942 = vcombine.high %v934, 0
      %v943 = vcombine.high %v941, 0
      %v945 = vunpack.c.l.b16 %v866
      %v946 = vpack.c.b16 %v945, %v945
      %947 = vrot.lane.b32.xlu0 %v946, 16
      %v948 = vpop.permute.xlu0 %947
      %v950 = vunpack.c.l.b16 %v840
      %v951 = vpack.c.b16 %v950, %v950
      %952 = vrot.lane.b32.xlu0 %v951, 32
      %v953 = vpop.permute.xlu0 %952
      %v955 = vunpack.c.l.b16 %v874
      %v956 = vpack.c.b16 %v955, %v955
      %957 = vrot.lane.b32.xlu0 %v956, 48
      %v958 = vpop.permute.xlu0 %957
      %v960 = vunpack.c.l.b16 %v839
      %v961 = vpack.c.b16 %v960, %v960
      %962 = vrot.lane.b32.xlu0 %v961, 64
      %v963 = vpop.permute.xlu0 %962
      %v965 = vunpack.c.l.b16 %v873
      %v966 = vpack.c.b16 %v965, %v965
      %967 = vrot.lane.b32.xlu0 %v966, 80
      %v968 = vpop.permute.xlu0 %967
      %v970 = vunpack.c.l.b16 %v841
      %v971 = vpack.c.b16 %v970, %v970
      %972 = vrot.lane.b32.xlu0 %v971, 96
      %v973 = vpop.permute.xlu0 %972
      %v975 = vunpack.c.l.b16 %v875
      %v976 = vpack.c.b16 %v975, %v975
      %977 = vrot.lane.b32.xlu0 %v976, 112
      %v978 = vpop.permute.xlu0 %977
      %v980 = vunpack.c.l.b16 %v934
      %v981 = vpack.c.b16 %v980, %v980
      %982 = vrot.lane.b32.xlu0 %v981, 16
      %v983 = vpop.permute.xlu0 %982
      %v985 = vunpack.c.l.b16 %v908
      %v986 = vpack.c.b16 %v985, %v985
      %987 = vrot.lane.b32.xlu0 %v986, 32
      %v988 = vpop.permute.xlu0 %987
      %v990 = vunpack.c.l.b16 %v942
      %v991 = vpack.c.b16 %v990, %v990
      %992 = vrot.lane.b32.xlu0 %v991, 48
      %v993 = vpop.permute.xlu0 %992
      %v995 = vunpack.c.l.b16 %v907
      %v996 = vpack.c.b16 %v995, %v995
      %997 = vrot.lane.b32.xlu0 %v996, 64
      %v998 = vpop.permute.xlu0 %997
      %v1000 = vunpack.c.l.b16 %v941
      %v1001 = vpack.c.b16 %v1000, %v1000
      %1002 = vrot.lane.b32.xlu0 %v1001, 80
      %v1003 = vpop.permute.xlu0 %1002
      %v1005 = vunpack.c.l.b16 %v909
      %v1006 = vpack.c.b16 %v1005, %v1005
      %1007 = vrot.lane.b32.xlu0 %v1006, 96
      %v1008 = vpop.permute.xlu0 %1007
      %v1010 = vunpack.c.l.b16 %v943
      %v1011 = vpack.c.b16 %v1010, %v1010
      %1012 = vrot.lane.b32.xlu0 %v1011, 112
      %v1013 = vpop.permute.xlu0 %1012
      %v1016 = vsel %vm447, %v832, %v948
      %v1018 = vsel %vm451, %v1016, %v953
      %v1020 = vsel %vm454, %v1018, %v958
      %v1022 = vsel %vm457, %v1020, %v963
      %v1024 = vsel %vm460, %v1022, %v968
      %v1026 = vsel %vm463, %v1024, %v973
      %v1028 = vsel %vm466, %v1026, %v978
      %v1031 = vsel %vm447, %v900, %v983
      %v1033 = vsel %vm451, %v1031, %v988
      %v1035 = vsel %vm454, %v1033, %v993
      %v1037 = vsel %vm457, %v1035, %v998
      %v1039 = vsel %vm460, %v1037, %v1003
      %v1041 = vsel %vm463, %v1039, %v1008
      %v1043 = vsel %vm466, %v1041, %v1013
      %v1044 = vld [vmem:[%s197 + $0x8] sm:$0x1]
      %v1045 = vld [vmem:[%s197 + $0x14] sm:$0x1]
      %v1046 = vld [vmem:[%s197 + $0x20] sm:$0x1]
      %v1047 = vld [vmem:[%s197 + $0x2c] sm:$0x1]
      %vm1048 = vsmask.f32 3328
      %vm1049 = vsmask.f32 7440
      %vm1050 = vmor %vm1048, %vm1049
      %v1052 = vrot.slane %v220, 4
      %v1053 = vshll.u32 %v209, 16
      %v1055 = vrot.slane %v1053, 5
      %v1056 = vor.u32 %v1052, %v1055
      %v1057 = vrot.slane %v1056, 4
      %v1058 = vshll.u32 %v210, 16
      %v1060 = vrot.slane %v1058, 5
      %v1061 = vsel %vm1050, %v1057, %v1060
      %v1063 = vrot.slane %v232, 4
      %v1064 = vor.u32 %v1063, %v1060
      %v1065 = vrot.slane %v1064, 4
      %v1067 = vshll.u32 %v1044, 16
      %v1069 = vrot.slane %v1067, 5
      %v1070 = vsel %vm1050, %v1065, %v1069
      %v1072 = vrot.slane %v221, 4
      %v1073 = vshll.u32 %v211, 16
      %v1075 = vrot.slane %v1073, 5
      %v1076 = vor.u32 %v1072, %v1075
      %v1077 = vrot.slane %v1076, 4
      %v1078 = vshll.u32 %v212, 16
      %v1080 = vrot.slane %v1078, 5
      %v1081 = vsel %vm1050, %v1077, %v1080
      %v1083 = vrot.slane %v233, 4
      %v1084 = vor.u32 %v1083, %v1080
      %v1085 = vrot.slane %v1084, 4
      %v1087 = vshll.u32 %v1045, 16
      %v1089 = vrot.slane %v1087, 5
      %v1090 = vsel %vm1050, %v1085, %v1089
      %v1092 = vrot.slane %v226, 4
      %v1093 = vshll.u32 %v213, 16
      %v1095 = vrot.slane %v1093, 5
      %v1096 = vor.u32 %v1092, %v1095
      %v1097 = vrot.slane %v1096, 4
      %v1098 = vshll.u32 %v214, 16
      %v1100 = vrot.slane %v1098, 5
      %v1101 = vsel %vm1050, %v1097, %v1100
      %v1103 = vrot.slane %v238, 4
      %v1104 = vor.u32 %v1103, %v1100
      %v1105 = vrot.slane %v1104, 4
      %v1107 = vshll.u32 %v1046, 16
      %v1109 = vrot.slane %v1107, 5
      %v1110 = vsel %vm1050, %v1105, %v1109
      %v1112 = vrot.slane %v227, 4
      %v1113 = vshll.u32 %v215, 16
      %v1115 = vrot.slane %v1113, 5
      %v1116 = vor.u32 %v1112, %v1115
      %v1117 = vrot.slane %v1116, 4
      %v1118 = vshll.u32 %v216, 16
      %v1120 = vrot.slane %v1118, 5
      %v1121 = vsel %vm1050, %v1117, %v1120
      %v1123 = vrot.slane %v239, 4
      %v1124 = vor.u32 %v1123, %v1120
      %v1125 = vrot.slane %v1124, 4
      %v1127 = vshll.u32 %v1047, 16
      %v1129 = vrot.slane %v1127, 5
      %v1130 = vsel %vm1050, %v1125, %v1129
      %v1133 = vpack.i.b16 %v1081, %v1061
      %v1134 = vshrl.u32 %v1061, 16
      %v1135 = vshrl.u32 %v1081, 16
      %v1136 = vpack.i.b16 %v1135, %v1134
      %v1139 = vpack.i.b16 %v1121, %v1101
      %v1140 = vshrl.u32 %v1101, 16
      %v1141 = vshrl.u32 %v1121, 16
      %v1142 = vpack.i.b16 %v1141, %v1140
      %v1145 = vpack.i.b16 %v1090, %v1070
      %v1146 = vshrl.u32 %v1070, 16
      %v1147 = vshrl.u32 %v1090, 16
      %v1148 = vpack.i.b16 %v1147, %v1146
      %v1151 = vpack.i.b16 %v1130, %v1110
      %v1152 = vshrl.u32 %v1110, 16
      %v1153 = vshrl.u32 %v1130, 16
      %v1154 = vpack.i.b16 %v1153, %v1152
      %v1157 = vunpack.c.l.s4 1983009808
      %v1158 = vunpack.c.0.s8 %v1157
      %v1159 = vlaneseq
      %v1160 = vshrl.u32 %v1159, 7
      %v1161 = vsub.s32 %v1158, %v1160
      %v1162 = vrot.slane %v1133, %v1161
      %v1165 = vunpack.c.l.s4 1983009808
      %v1166 = vunpack.c.0.s8 %v1165
      %v1167 = vlaneseq
      %v1168 = vshrl.u32 %v1167, 7
      %v1169 = vsub.s32 %v1166, %v1168
      %v1170 = vrot.slane %v1139, %v1169
      %v1171 = vcombine.low %v1162, %v1170
      %v1172 = vcombine.high %v1162, %v1170
      %v1174 = vunpack.c.l.s4 1934713408
      %v1175 = vunpack.c.0.s8 %v1174
      %v1176 = vlaneseq
      %v1177 = vshrl.u32 %v1176, 7
      %v1178 = vsub.s32 %v1175, %v1177
      %v1179 = vrot.slane %v1171, %v1178
      %v1181 = vunpack.c.l.s4 1934713408
      %v1182 = vunpack.c.0.s8 %v1181
      %v1183 = vlaneseq
      %v1184 = vshrl.u32 %v1183, 7
      %v1185 = vsub.s32 %v1182, %v1184
      %v1186 = vrot.slane %v1172, %v1185
      %v1187 = vcombine.high %v1179, 0
      %v1188 = vcombine.high %v1186, 0
      %v1191 = vunpack.c.l.s4 1983009808
      %v1192 = vunpack.c.0.s8 %v1191
      %v1193 = vlaneseq
      %v1194 = vshrl.u32 %v1193, 7
      %v1195 = vsub.s32 %v1192, %v1194
      %v1196 = vrot.slane %v1136, %v1195
      %v1199 = vunpack.c.l.s4 1983009808
      %v1200 = vunpack.c.0.s8 %v1199
      %v1201 = vlaneseq
      %v1202 = vshrl.u32 %v1201, 7
      %v1203 = vsub.s32 %v1200, %v1202
      %v1204 = vrot.slane %v1142, %v1203
      %v1205 = vcombine.low %v1196, %v1204
      %v1206 = vcombine.high %v1196, %v1204
      %v1208 = vunpack.c.l.s4 1934713408
      %v1209 = vunpack.c.0.s8 %v1208
      %v1210 = vlaneseq
      %v1211 = vshrl.u32 %v1210, 7
      %v1212 = vsub.s32 %v1209, %v1211
      %v1213 = vrot.slane %v1205, %v1212
      %v1215 = vunpack.c.l.s4 1934713408
      %v1216 = vunpack.c.0.s8 %v1215
      %v1217 = vlaneseq
      %v1218 = vshrl.u32 %v1217, 7
      %v1219 = vsub.s32 %v1216, %v1218
      %v1220 = vrot.slane %v1206, %v1219
      %v1221 = vcombine.high %v1213, 0
      %v1222 = vcombine.high %v1220, 0
      %v1225 = vunpack.c.l.s4 1983009808
      %v1226 = vunpack.c.0.s8 %v1225
      %v1227 = vlaneseq
      %v1228 = vshrl.u32 %v1227, 7
      %v1229 = vsub.s32 %v1226, %v1228
      %v1230 = vrot.slane %v1145, %v1229
      %v1233 = vunpack.c.l.s4 1983009808
      %v1234 = vunpack.c.0.s8 %v1233
      %v1235 = vlaneseq
      %v1236 = vshrl.u32 %v1235, 7
      %v1237 = vsub.s32 %v1234, %v1236
      %v1238 = vrot.slane %v1151, %v1237
      %v1239 = vcombine.low %v1230, %v1238
      %v1240 = vcombine.high %v1230, %v1238
      %v1242 = vunpack.c.l.s4 1934713408
      %v1243 = vunpack.c.0.s8 %v1242
      %v1244 = vlaneseq
      %v1245 = vshrl.u32 %v1244, 7
      %v1246 = vsub.s32 %v1243, %v1245
      %v1247 = vrot.slane %v1239, %v1246
      %v1249 = vunpack.c.l.s4 1934713408
      %v1250 = vunpack.c.0.s8 %v1249
      %v1251 = vlaneseq
      %v1252 = vshrl.u32 %v1251, 7
      %v1253 = vsub.s32 %v1250, %v1252
      %v1254 = vrot.slane %v1240, %v1253
      %v1255 = vcombine.high %v1247, 0
      %v1256 = vcombine.high %v1254, 0
      %v1259 = vunpack.c.l.s4 1983009808
      %v1260 = vunpack.c.0.s8 %v1259
      %v1261 = vlaneseq
      %v1262 = vshrl.u32 %v1261, 7
      %v1263 = vsub.s32 %v1260, %v1262
      %v1264 = vrot.slane %v1148, %v1263
      %v1267 = vunpack.c.l.s4 1983009808
      %v1268 = vunpack.c.0.s8 %v1267
      %v1269 = vlaneseq
      %v1270 = vshrl.u32 %v1269, 7
      %v1271 = vsub.s32 %v1268, %v1270
      %v1272 = vrot.slane %v1154, %v1271
      %v1273 = vcombine.low %v1264, %v1272
      %v1274 = vcombine.high %v1264, %v1272
      %v1276 = vunpack.c.l.s4 1934713408
      %v1277 = vunpack.c.0.s8 %v1276
      %v1278 = vlaneseq
      %v1279 = vshrl.u32 %v1278, 7
      %v1280 = vsub.s32 %v1277, %v1279
      %v1281 = vrot.slane %v1273, %v1280
      %v1283 = vunpack.c.l.s4 1934713408
      %v1284 = vunpack.c.0.s8 %v1283
      %v1285 = vlaneseq
      %v1286 = vshrl.u32 %v1285, 7
      %v1287 = vsub.s32 %v1284, %v1286
      %v1288 = vrot.slane %v1274, %v1287
      %v1289 = vcombine.high %v1281, 0
      %v1290 = vcombine.high %v1288, 0
      %v1292 = vunpack.c.l.b16 %v1213
      %v1293 = vpack.c.b16 %v1292, %v1292
      %1294 = vrot.lane.b32.xlu0 %v1293, 16
      %v1295 = vpop.permute.xlu0 %1294
      %v1297 = vunpack.c.l.b16 %v1187
      %v1298 = vpack.c.b16 %v1297, %v1297
      %1299 = vrot.lane.b32.xlu0 %v1298, 32
      %v1300 = vpop.permute.xlu0 %1299
      %v1302 = vunpack.c.l.b16 %v1221
      %v1303 = vpack.c.b16 %v1302, %v1302
      %1304 = vrot.lane.b32.xlu0 %v1303, 48
      %v1305 = vpop.permute.xlu0 %1304
      %v1307 = vunpack.c.l.b16 %v1186
      %v1308 = vpack.c.b16 %v1307, %v1307
      %1309 = vrot.lane.b32.xlu0 %v1308, 64
      %v1310 = vpop.permute.xlu0 %1309
      %v1312 = vunpack.c.l.b16 %v1220
      %v1313 = vpack.c.b16 %v1312, %v1312
      %1314 = vrot.lane.b32.xlu0 %v1313, 80
      %v1315 = vpop.permute.xlu0 %1314
      %v1317 = vunpack.c.l.b16 %v1188
      %v1318 = vpack.c.b16 %v1317, %v1317
      %1319 = vrot.lane.b32.xlu0 %v1318, 96
      %v1320 = vpop.permute.xlu0 %1319
      %v1322 = vunpack.c.l.b16 %v1222
      %v1323 = vpack.c.b16 %v1322, %v1322
      %1324 = vrot.lane.b32.xlu0 %v1323, 112
      %v1325 = vpop.permute.xlu0 %1324
      %v1327 = vunpack.c.l.b16 %v1281
      %v1328 = vpack.c.b16 %v1327, %v1327
      %1329 = vrot.lane.b32.xlu0 %v1328, 16
      %v1330 = vpop.permute.xlu0 %1329
      %v1332 = vunpack.c.l.b16 %v1255
      %v1333 = vpack.c.b16 %v1332, %v1332
      %1334 = vrot.lane.b32.xlu0 %v1333, 32
      %v1335 = vpop.permute.xlu0 %1334
      %v1337 = vunpack.c.l.b16 %v1289
      %v1338 = vpack.c.b16 %v1337, %v1337
      %1339 = vrot.lane.b32.xlu0 %v1338, 48
      %v1340 = vpop.permute.xlu0 %1339
      %v1342 = vunpack.c.l.b16 %v1254
      %v1343 = vpack.c.b16 %v1342, %v1342
      %1344 = vrot.lane.b32.xlu0 %v1343, 64
      %v1345 = vpop.permute.xlu0 %1344
      %v1347 = vunpack.c.l.b16 %v1288
      %v1348 = vpack.c.b16 %v1347, %v1347
      %1349 = vrot.lane.b32.xlu0 %v1348, 80
      %v1350 = vpop.permute.xlu0 %1349
      %v1352 = vunpack.c.l.b16 %v1256
      %v1353 = vpack.c.b16 %v1352, %v1352
      %1354 = vrot.lane.b32.xlu0 %v1353, 96
      %v1355 = vpop.permute.xlu0 %1354
      %v1357 = vunpack.c.l.b16 %v1290
      %v1358 = vpack.c.b16 %v1357, %v1357
      %1359 = vrot.lane.b32.xlu0 %v1358, 112
      %v1360 = vpop.permute.xlu0 %1359
      %v1363 = vsel %vm447, %v1179, %v1295
      %v1365 = vsel %vm451, %v1363, %v1300
      %v1367 = vsel %vm454, %v1365, %v1305
      %v1369 = vsel %vm457, %v1367, %v1310
      %v1371 = vsel %vm460, %v1369, %v1315
      %v1373 = vsel %vm463, %v1371, %v1320
      %v1375 = vsel %vm466, %v1373, %v1325
      %v1378 = vsel %vm447, %v1247, %v1330
      %v1380 = vsel %vm451, %v1378, %v1335
      %v1382 = vsel %vm454, %v1380, %v1340
      %v1384 = vsel %vm457, %v1382, %v1345
      %v1386 = vsel %vm460, %v1384, %v1350
      %v1388 = vsel %vm463, %v1386, %v1355
      %v1390 = vsel %vm466, %v1388, %v1360
      %1391 = vrot.lane.b32.xlu0 %v1061, 127
      %v1392 = vpop.permute.xlu0 %1391
      %1393 = vrot.lane.b32.xlu0 %v1070, 127
      %v1394 = vpop.permute.xlu0 %1393
      %1395 = vrot.lane.b32.xlu0 %v1081, 127
      %v1396 = vpop.permute.xlu0 %1395
      %1397 = vrot.lane.b32.xlu0 %v1090, 127
      %v1398 = vpop.permute.xlu0 %1397
      %1399 = vrot.lane.b32.xlu0 %v1101, 127
      %v1400 = vpop.permute.xlu0 %1399
      %1401 = vrot.lane.b32.xlu0 %v1110, 127
      %v1402 = vpop.permute.xlu0 %1401
      %1403 = vrot.lane.b32.xlu0 %v1121, 127
      %v1404 = vpop.permute.xlu0 %1403
      %1405 = vrot.lane.b32.xlu0 %v1130, 127
      %v1406 = vpop.permute.xlu0 %1405
      %v1409 = vpack.i.b16 %v1396, %v1392
      %v1410 = vshrl.u32 %v1392, 16
      %v1411 = vshrl.u32 %v1396, 16
      %v1412 = vpack.i.b16 %v1411, %v1410
      %v1415 = vpack.i.b16 %v1404, %v1400
      %v1416 = vshrl.u32 %v1400, 16
      %v1417 = vshrl.u32 %v1404, 16
      %v1418 = vpack.i.b16 %v1417, %v1416
      %v1421 = vpack.i.b16 %v1398, %v1394
      %v1422 = vshrl.u32 %v1394, 16
      %v1423 = vshrl.u32 %v1398, 16
      %v1424 = vpack.i.b16 %v1423, %v1422
      %v1427 = vpack.i.b16 %v1406, %v1402
      %v1428 = vshrl.u32 %v1402, 16
      %v1429 = vshrl.u32 %v1406, 16
      %v1430 = vpack.i.b16 %v1429, %v1428
      %v1433 = vunpack.c.l.s4 1983009808
      %v1434 = vunpack.c.0.s8 %v1433
      %v1435 = vlaneseq
      %v1436 = vshrl.u32 %v1435, 7
      %v1437 = vsub.s32 %v1434, %v1436
      %v1438 = vrot.slane %v1409, %v1437
      %v1441 = vunpack.c.l.s4 1983009808
      %v1442 = vunpack.c.0.s8 %v1441
      %v1443 = vlaneseq
      %v1444 = vshrl.u32 %v1443, 7
      %v1445 = vsub.s32 %v1442, %v1444
      %v1446 = vrot.slane %v1415, %v1445
      %v1447 = vcombine.low %v1438, %v1446
      %v1448 = vcombine.high %v1438, %v1446
      %v1450 = vunpack.c.l.s4 1934713408
      %v1451 = vunpack.c.0.s8 %v1450
      %v1452 = vlaneseq
      %v1453 = vshrl.u32 %v1452, 7
      %v1454 = vsub.s32 %v1451, %v1453
      %v1455 = vrot.slane %v1447, %v1454
      %v1457 = vunpack.c.l.s4 1934713408
      %v1458 = vunpack.c.0.s8 %v1457
      %v1459 = vlaneseq
      %v1460 = vshrl.u32 %v1459, 7
      %v1461 = vsub.s32 %v1458, %v1460
      %v1462 = vrot.slane %v1448, %v1461
      %v1463 = vcombine.high %v1455, 0
      %v1464 = vcombine.high %v1462, 0
      %v1467 = vunpack.c.l.s4 1983009808
      %v1468 = vunpack.c.0.s8 %v1467
      %v1469 = vlaneseq
      %v1470 = vshrl.u32 %v1469, 7
      %v1471 = vsub.s32 %v1468, %v1470
      %v1472 = vrot.slane %v1412, %v1471
      %v1475 = vunpack.c.l.s4 1983009808
      %v1476 = vunpack.c.0.s8 %v1475
      %v1477 = vlaneseq
      %v1478 = vshrl.u32 %v1477, 7
      %v1479 = vsub.s32 %v1476, %v1478
      %v1480 = vrot.slane %v1418, %v1479
      %v1481 = vcombine.low %v1472, %v1480
      %v1482 = vcombine.high %v1472, %v1480
      %v1484 = vunpack.c.l.s4 1934713408
      %v1485 = vunpack.c.0.s8 %v1484
      %v1486 = vlaneseq
      %v1487 = vshrl.u32 %v1486, 7
      %v1488 = vsub.s32 %v1485, %v1487
      %v1489 = vrot.slane %v1481, %v1488
      %v1491 = vunpack.c.l.s4 1934713408
      %v1492 = vunpack.c.0.s8 %v1491
      %v1493 = vlaneseq
      %v1494 = vshrl.u32 %v1493, 7
      %v1495 = vsub.s32 %v1492, %v1494
      %v1496 = vrot.slane %v1482, %v1495
      %v1497 = vcombine.high %v1489, 0
      %v1498 = vcombine.high %v1496, 0
      %v1501 = vunpack.c.l.s4 1983009808
      %v1502 = vunpack.c.0.s8 %v1501
      %v1503 = vlaneseq
      %v1504 = vshrl.u32 %v1503, 7
      %v1505 = vsub.s32 %v1502, %v1504
      %v1506 = vrot.slane %v1421, %v1505
      %v1509 = vunpack.c.l.s4 1983009808
      %v1510 = vunpack.c.0.s8 %v1509
      %v1511 = vlaneseq
      %v1512 = vshrl.u32 %v1511, 7
      %v1513 = vsub.s32 %v1510, %v1512
      %v1514 = vrot.slane %v1427, %v1513
      %v1515 = vcombine.low %v1506, %v1514
      %v1516 = vcombine.high %v1506, %v1514
      %v1518 = vunpack.c.l.s4 1934713408
      %v1519 = vunpack.c.0.s8 %v1518
      %v1520 = vlaneseq
      %v1521 = vshrl.u32 %v1520, 7
      %v1522 = vsub.s32 %v1519, %v1521
      %v1523 = vrot.slane %v1515, %v1522
      %v1525 = vunpack.c.l.s4 1934713408
      %v1526 = vunpack.c.0.s8 %v1525
      %v1527 = vlaneseq
      %v1528 = vshrl.u32 %v1527, 7
      %v1529 = vsub.s32 %v1526, %v1528
      %v1530 = vrot.slane %v1516, %v1529
      %v1531 = vcombine.high %v1523, 0
      %v1532 = vcombine.high %v1530, 0
      %v1535 = vunpack.c.l.s4 1983009808
      %v1536 = vunpack.c.0.s8 %v1535
      %v1537 = vlaneseq
      %v1538 = vshrl.u32 %v1537, 7
      %v1539 = vsub.s32 %v1536, %v1538
      %v1540 = vrot.slane %v1424, %v1539
      %v1543 = vunpack.c.l.s4 1983009808
      %v1544 = vunpack.c.0.s8 %v1543
      %v1545 = vlaneseq
      %v1546 = vshrl.u32 %v1545, 7
      %v1547 = vsub.s32 %v1544, %v1546
      %v1548 = vrot.slane %v1430, %v1547
      %v1549 = vcombine.low %v1540, %v1548
      %v1550 = vcombine.high %v1540, %v1548
      %v1552 = vunpack.c.l.s4 1934713408
      %v1553 = vunpack.c.0.s8 %v1552
      %v1554 = vlaneseq
      %v1555 = vshrl.u32 %v1554, 7
      %v1556 = vsub.s32 %v1553, %v1555
      %v1557 = vrot.slane %v1549, %v1556
      %v1559 = vunpack.c.l.s4 1934713408
      %v1560 = vunpack.c.0.s8 %v1559
      %v1561 = vlaneseq
      %v1562 = vshrl.u32 %v1561, 7
      %v1563 = vsub.s32 %v1560, %v1562
      %v1564 = vrot.slane %v1550, %v1563
      %v1565 = vcombine.high %v1557, 0
      %v1566 = vcombine.high %v1564, 0
      %v1568 = vunpack.c.l.b16 %v1489
      %v1569 = vpack.c.b16 %v1568, %v1568
      %1570 = vrot.lane.b32.xlu0 %v1569, 16
      %v1571 = vpop.permute.xlu0 %1570
      %v1573 = vunpack.c.l.b16 %v1463
      %v1574 = vpack.c.b16 %v1573, %v1573
      %1575 = vrot.lane.b32.xlu0 %v1574, 32
      %v1576 = vpop.permute.xlu0 %1575
      %v1578 = vunpack.c.l.b16 %v1497
      %v1579 = vpack.c.b16 %v1578, %v1578
      %1580 = vrot.lane.b32.xlu0 %v1579, 48
      %v1581 = vpop.permute.xlu0 %1580
      %v1583 = vunpack.c.l.b16 %v1462
      %v1584 = vpack.c.b16 %v1583, %v1583
      %1585 = vrot.lane.b32.xlu0 %v1584, 64
      %v1586 = vpop.permute.xlu0 %1585
      %v1588 = vunpack.c.l.b16 %v1496
      %v1589 = vpack.c.b16 %v1588, %v1588
      %1590 = vrot.lane.b32.xlu0 %v1589, 80
      %v1591 = vpop.permute.xlu0 %1590
      %v1593 = vunpack.c.l.b16 %v1464
      %v1594 = vpack.c.b16 %v1593, %v1593
      %1595 = vrot.lane.b32.xlu0 %v1594, 96
      %v1596 = vpop.permute.xlu0 %1595
      %v1598 = vunpack.c.l.b16 %v1498
      %v1599 = vpack.c.b16 %v1598, %v1598
      %1600 = vrot.lane.b32.xlu0 %v1599, 112
      %v1601 = vpop.permute.xlu0 %1600
      %v1603 = vunpack.c.l.b16 %v1557
      %v1604 = vpack.c.b16 %v1603, %v1603
      %1605 = vrot.lane.b32.xlu0 %v1604, 16
      %v1606 = vpop.permute.xlu0 %1605
      %v1608 = vunpack.c.l.b16 %v1531
      %v1609 = vpack.c.b16 %v1608, %v1608
      %1610 = vrot.lane.b32.xlu0 %v1609, 32
      %v1611 = vpop.permute.xlu0 %1610
      %v1613 = vunpack.c.l.b16 %v1565
      %v1614 = vpack.c.b16 %v1613, %v1613
      %1615 = vrot.lane.b32.xlu0 %v1614, 48
      %v1616 = vpop.permute.xlu0 %1615
      %v1618 = vunpack.c.l.b16 %v1530
      %v1619 = vpack.c.b16 %v1618, %v1618
      %1620 = vrot.lane.b32.xlu0 %v1619, 64
      %v1621 = vpop.permute.xlu0 %1620
      %v1623 = vunpack.c.l.b16 %v1564
      %v1624 = vpack.c.b16 %v1623, %v1623
      %1625 = vrot.lane.b32.xlu0 %v1624, 80
      %v1626 = vpop.permute.xlu0 %1625
      %v1628 = vunpack.c.l.b16 %v1532
      %v1629 = vpack.c.b16 %v1628, %v1628
      %1630 = vrot.lane.b32.xlu0 %v1629, 96
      %v1631 = vpop.permute.xlu0 %1630
      %v1633 = vunpack.c.l.b16 %v1566
      %v1634 = vpack.c.b16 %v1633, %v1633
      %1635 = vrot.lane.b32.xlu0 %v1634, 112
      %v1636 = vpop.permute.xlu0 %1635
      %v1639 = vsel %vm447, %v1455, %v1571
      %v1641 = vsel %vm451, %v1639, %v1576
      %v1643 = vsel %vm454, %v1641, %v1581
      %v1645 = vsel %vm457, %v1643, %v1586
      %v1647 = vsel %vm460, %v1645, %v1591
      %v1649 = vsel %vm463, %v1647, %v1596
      %v1651 = vsel %vm466, %v1649, %v1601
      %v1654 = vsel %vm447, %v1523, %v1606
      %v1656 = vsel %vm451, %v1654, %v1611
      %v1658 = vsel %vm454, %v1656, %v1616
      %v1660 = vsel %vm457, %v1658, %v1621
      %v1662 = vsel %vm460, %v1660, %v1626
      %v1664 = vsel %vm463, %v1662, %v1631
      %v1666 = vsel %vm466, %v1664, %v1636
      %1667 = vrot.lane.b32.xlu0 %v1061, 126
      %v1668 = vpop.permute.xlu0 %1667
      %1669 = vrot.lane.b32.xlu0 %v1070, 126
      %v1670 = vpop.permute.xlu0 %1669
      %1671 = vrot.lane.b32.xlu0 %v1081, 126
      %v1672 = vpop.permute.xlu0 %1671
      %1673 = vrot.lane.b32.xlu0 %v1090, 126
      %v1674 = vpop.permute.xlu0 %1673
      %1675 = vrot.lane.b32.xlu0 %v1101, 126
      %v1676 = vpop.permute.xlu0 %1675
      %1677 = vrot.lane.b32.xlu0 %v1110, 126
      %v1678 = vpop.permute.xlu0 %1677
      %1679 = vrot.lane.b32.xlu0 %v1121, 126
      %v1680 = vpop.permute.xlu0 %1679
      %1681 = vrot.lane.b32.xlu0 %v1130, 126
      %v1682 = vpop.permute.xlu0 %1681
      %v1685 = vpack.i.b16 %v1672, %v1668
      %v1686 = vshrl.u32 %v1668, 16
      %v1687 = vshrl.u32 %v1672, 16
      %v1688 = vpack.i.b16 %v1687, %v1686
      %v1691 = vpack.i.b16 %v1680, %v1676
      %v1692 = vshrl.u32 %v1676, 16
      %v1693 = vshrl.u32 %v1680, 16
      %v1694 = vpack.i.b16 %v1693, %v1692
      %v1697 = vpack.i.b16 %v1674, %v1670
      %v1698 = vshrl.u32 %v1670, 16
      %v1699 = vshrl.u32 %v1674, 16
      %v1700 = vpack.i.b16 %v1699, %v1698
      %v1703 = vpack.i.b16 %v1682, %v1678
      %v1704 = vshrl.u32 %v1678, 16
      %v1705 = vshrl.u32 %v1682, 16
      %v1706 = vpack.i.b16 %v1705, %v1704
      %v1709 = vunpack.c.l.s4 1983009808
      %v1710 = vunpack.c.0.s8 %v1709
      %v1711 = vlaneseq
      %v1712 = vshrl.u32 %v1711, 7
      %v1713 = vsub.s32 %v1710, %v1712
      %v1714 = vrot.slane %v1685, %v1713
      %v1717 = vunpack.c.l.s4 1983009808
      %v1718 = vunpack.c.0.s8 %v1717
      %v1719 = vlaneseq
      %v1720 = vshrl.u32 %v1719, 7
      %v1721 = vsub.s32 %v1718, %v1720
      %v1722 = vrot.slane %v1691, %v1721
      %v1723 = vcombine.low %v1714, %v1722
      %v1724 = vcombine.high %v1714, %v1722
      %v1726 = vunpack.c.l.s4 1934713408
      %v1727 = vunpack.c.0.s8 %v1726
      %v1728 = vlaneseq
      %v1729 = vshrl.u32 %v1728, 7
      %v1730 = vsub.s32 %v1727, %v1729
      %v1731 = vrot.slane %v1723, %v1730
      %v1733 = vunpack.c.l.s4 1934713408
      %v1734 = vunpack.c.0.s8 %v1733
      %v1735 = vlaneseq
      %v1736 = vshrl.u32 %v1735, 7
      %v1737 = vsub.s32 %v1734, %v1736
      %v1738 = vrot.slane %v1724, %v1737
      %v1739 = vcombine.high %v1731, 0
      %v1740 = vcombine.high %v1738, 0
      %v1743 = vunpack.c.l.s4 1983009808
      %v1744 = vunpack.c.0.s8 %v1743
      %v1745 = vlaneseq
      %v1746 = vshrl.u32 %v1745, 7
      %v1747 = vsub.s32 %v1744, %v1746
      %v1748 = vrot.slane %v1688, %v1747
      %v1751 = vunpack.c.l.s4 1983009808
      %v1752 = vunpack.c.0.s8 %v1751
      %v1753 = vlaneseq
      %v1754 = vshrl.u32 %v1753, 7
      %v1755 = vsub.s32 %v1752, %v1754
      %v1756 = vrot.slane %v1694, %v1755
      %v1757 = vcombine.low %v1748, %v1756
      %v1758 = vcombine.high %v1748, %v1756
      %v1760 = vunpack.c.l.s4 1934713408
      %v1761 = vunpack.c.0.s8 %v1760
      %v1762 = vlaneseq
      %v1763 = vshrl.u32 %v1762, 7
      %v1764 = vsub.s32 %v1761, %v1763
      %v1765 = vrot.slane %v1757, %v1764
      %v1767 = vunpack.c.l.s4 1934713408
      %v1768 = vunpack.c.0.s8 %v1767
      %v1769 = vlaneseq
      %v1770 = vshrl.u32 %v1769, 7
      %v1771 = vsub.s32 %v1768, %v1770
      %v1772 = vrot.slane %v1758, %v1771
      %v1773 = vcombine.high %v1765, 0
      %v1774 = vcombine.high %v1772, 0
      %v1777 = vunpack.c.l.s4 1983009808
      %v1778 = vunpack.c.0.s8 %v1777
      %v1779 = vlaneseq
      %v1780 = vshrl.u32 %v1779, 7
      %v1781 = vsub.s32 %v1778, %v1780
      %v1782 = vrot.slane %v1697, %v1781
      %v1785 = vunpack.c.l.s4 1983009808
      %v1786 = vunpack.c.0.s8 %v1785
      %v1787 = vlaneseq
      %v1788 = vshrl.u32 %v1787, 7
      %v1789 = vsub.s32 %v1786, %v1788
      %v1790 = vrot.slane %v1703, %v1789
      %v1791 = vcombine.low %v1782, %v1790
      %v1792 = vcombine.high %v1782, %v1790
      %v1794 = vunpack.c.l.s4 1934713408
      %v1795 = vunpack.c.0.s8 %v1794
      %v1796 = vlaneseq
      %v1797 = vshrl.u32 %v1796, 7
      %v1798 = vsub.s32 %v1795, %v1797
      %v1799 = vrot.slane %v1791, %v1798
      %v1801 = vunpack.c.l.s4 1934713408
      %v1802 = vunpack.c.0.s8 %v1801
      %v1803 = vlaneseq
      %v1804 = vshrl.u32 %v1803, 7
      %v1805 = vsub.s32 %v1802, %v1804
      %v1806 = vrot.slane %v1792, %v1805
      %v1807 = vcombine.high %v1799, 0
      %v1808 = vcombine.high %v1806, 0
      %v1811 = vunpack.c.l.s4 1983009808
      %v1812 = vunpack.c.0.s8 %v1811
      %v1813 = vlaneseq
      %v1814 = vshrl.u32 %v1813, 7
      %v1815 = vsub.s32 %v1812, %v1814
      %v1816 = vrot.slane %v1700, %v1815
      %v1819 = vunpack.c.l.s4 1983009808
      %v1820 = vunpack.c.0.s8 %v1819
      %v1821 = vlaneseq
      %v1822 = vshrl.u32 %v1821, 7
      %v1823 = vsub.s32 %v1820, %v1822
      %v1824 = vrot.slane %v1706, %v1823
      %v1825 = vcombine.low %v1816, %v1824
      %v1826 = vcombine.high %v1816, %v1824
      %v1828 = vunpack.c.l.s4 1934713408
      %v1829 = vunpack.c.0.s8 %v1828
      %v1830 = vlaneseq
      %v1831 = vshrl.u32 %v1830, 7
      %v1832 = vsub.s32 %v1829, %v1831
      %v1833 = vrot.slane %v1825, %v1832
      %v1835 = vunpack.c.l.s4 1934713408
      %v1836 = vunpack.c.0.s8 %v1835
      %v1837 = vlaneseq
      %v1838 = vshrl.u32 %v1837, 7
      %v1839 = vsub.s32 %v1836, %v1838
      %v1840 = vrot.slane %v1826, %v1839
      %v1841 = vcombine.high %v1833, 0
      %v1842 = vcombine.high %v1840, 0
      %v1844 = vunpack.c.l.b16 %v1765
      %v1845 = vpack.c.b16 %v1844, %v1844
      %1846 = vrot.lane.b32.xlu0 %v1845, 16
      %v1847 = vpop.permute.xlu0 %1846
      %v1849 = vunpack.c.l.b16 %v1739
      %v1850 = vpack.c.b16 %v1849, %v1849
      %1851 = vrot.lane.b32.xlu0 %v1850, 32
      %v1852 = vpop.permute.xlu0 %1851
      %v1854 = vunpack.c.l.b16 %v1773
      %v1855 = vpack.c.b16 %v1854, %v1854
      %1856 = vrot.lane.b32.xlu0 %v1855, 48
      %v1857 = vpop.permute.xlu0 %1856
      %v1859 = vunpack.c.l.b16 %v1738
      %v1860 = vpack.c.b16 %v1859, %v1859
      %1861 = vrot.lane.b32.xlu0 %v1860, 64
      %v1862 = vpop.permute.xlu0 %1861
      %v1864 = vunpack.c.l.b16 %v1772
      %v1865 = vpack.c.b16 %v1864, %v1864
      %1866 = vrot.lane.b32.xlu0 %v1865, 80
      %v1867 = vpop.permute.xlu0 %1866
      %v1869 = vunpack.c.l.b16 %v1740
      %v1870 = vpack.c.b16 %v1869, %v1869
      %1871 = vrot.lane.b32.xlu0 %v1870, 96
      %v1872 = vpop.permute.xlu0 %1871
      %v1874 = vunpack.c.l.b16 %v1774
      %v1875 = vpack.c.b16 %v1874, %v1874
      %1876 = vrot.lane.b32.xlu0 %v1875, 112
      %v1877 = vpop.permute.xlu0 %1876
      %v1879 = vunpack.c.l.b16 %v1833
      %v1880 = vpack.c.b16 %v1879, %v1879
      %1881 = vrot.lane.b32.xlu0 %v1880, 16
      %v1882 = vpop.permute.xlu0 %1881
      %v1884 = vunpack.c.l.b16 %v1807
      %v1885 = vpack.c.b16 %v1884, %v1884
      %1886 = vrot.lane.b32.xlu0 %v1885, 32
      %v1887 = vpop.permute.xlu0 %1886
      %v1889 = vunpack.c.l.b16 %v1841
      %v1890 = vpack.c.b16 %v1889, %v1889
      %1891 = vrot.lane.b32.xlu0 %v1890, 48
      %v1892 = vpop.permute.xlu0 %1891
      %v1894 = vunpack.c.l.b16 %v1806
      %v1895 = vpack.c.b16 %v1894, %v1894
      %1896 = vrot.lane.b32.xlu0 %v1895, 64
      %v1897 = vpop.permute.xlu0 %1896
      %v1899 = vunpack.c.l.b16 %v1840
      %v1900 = vpack.c.b16 %v1899, %v1899
      %1901 = vrot.lane.b32.xlu0 %v1900, 80
      %v1902 = vpop.permute.xlu0 %1901
      %v1904 = vunpack.c.l.b16 %v1808
      %v1905 = vpack.c.b16 %v1904, %v1904
      %1906 = vrot.lane.b32.xlu0 %v1905, 96
      %v1907 = vpop.permute.xlu0 %1906
      %v1909 = vunpack.c.l.b16 %v1842
      %v1910 = vpack.c.b16 %v1909, %v1909
      %1911 = vrot.lane.b32.xlu0 %v1910, 112
      %v1912 = vpop.permute.xlu0 %1911
      %v1915 = vsel %vm447, %v1731, %v1847
      %v1917 = vsel %vm451, %v1915, %v1852
      %v1919 = vsel %vm454, %v1917, %v1857
      %v1921 = vsel %vm457, %v1919, %v1862
      %v1923 = vsel %vm460, %v1921, %v1867
      %v1925 = vsel %vm463, %v1923, %v1872
      %v1927 = vsel %vm466, %v1925, %v1877
      %v1930 = vsel %vm447, %v1799, %v1882
      %v1932 = vsel %vm451, %v1930, %v1887
      %v1934 = vsel %vm454, %v1932, %v1892
      %v1936 = vsel %vm457, %v1934, %v1897
      %v1938 = vsel %vm460, %v1936, %v1902
      %v1940 = vsel %vm463, %v1938, %v1907
      %v1942 = vsel %vm466, %v1940, %v1912
      %v1943 = vld [vmem:[%s197] sm:$0xe]
      %v1944 = vld [vmem:[%s197 + $0xc] sm:$0xe]
      %v1945 = vld [vmem:[%s197 + $0x18] sm:$0xe]
      %v1946 = vld [vmem:[%s197 + $0x24] sm:$0xe]
      %vm1955 = vcmask 1042432
      %vm1956 = vcmask 1046532
      %vm1957 = vmor %vm1955, %vm1956
      %v1958 = vrot.slane %v1943, 5
      %v1959 = vrot.slane %v1958, 4
      %v1960 = vrot.slane %v210, 5
      %v1961 = vsel %vm1957, %v1959, %v1960
      %v1962 = vrot.slane %v1960, 4
      %v1963 = vrot.slane %v1044, 5
      %v1964 = vsel %vm1957, %v1962, %v1963
      %v1965 = vrot.slane %v1944, 5
      %v1966 = vrot.slane %v1965, 4
      %v1967 = vrot.slane %v212, 5
      %v1968 = vsel %vm1957, %v1966, %v1967
      %v1969 = vrot.slane %v1967, 4
      %v1970 = vrot.slane %v1045, 5
      %v1971 = vsel %vm1957, %v1969, %v1970
      %v1972 = vrot.slane %v1945, 5
      %v1973 = vrot.slane %v1972, 4
      %v1974 = vrot.slane %v214, 5
      %v1975 = vsel %vm1957, %v1973, %v1974
      %v1976 = vrot.slane %v1974, 4
      %v1977 = vrot.slane %v1046, 5
      %v1978 = vsel %vm1957, %v1976, %v1977
      %v1979 = vrot.slane %v1946, 5
      %v1980 = vrot.slane %v1979, 4
      %v1981 = vrot.slane %v216, 5
      %v1982 = vsel %vm1957, %v1980, %v1981
      %v1983 = vrot.slane %v1981, 4
      %v1984 = vrot.slane %v1047, 5
      %v1985 = vsel %vm1957, %v1983, %v1984
      %v1988 = vpack.i.b16 %v1968, %v1961
      %v1989 = vshrl.u32 %v1961, 16
      %v1990 = vshrl.u32 %v1968, 16
      %v1991 = vpack.i.b16 %v1990, %v1989
      %v1994 = vpack.i.b16 %v1982, %v1975
      %v1995 = vshrl.u32 %v1975, 16
      %v1996 = vshrl.u32 %v1982, 16
      %v1997 = vpack.i.b16 %v1996, %v1995
      %v2000 = vpack.i.b16 %v1971, %v1964
      %v2001 = vshrl.u32 %v1964, 16
      %v2002 = vshrl.u32 %v1971, 16
      %v2003 = vpack.i.b16 %v2002, %v2001
      %v2006 = vpack.i.b16 %v1985, %v1978
      %v2007 = vshrl.u32 %v1978, 16
      %v2008 = vshrl.u32 %v1985, 16
      %v2009 = vpack.i.b16 %v2008, %v2007
      %v2012 = vunpack.c.l.s4 1983009808
      %v2013 = vunpack.c.0.s8 %v2012
      %v2014 = vlaneseq
      %v2015 = vshrl.u32 %v2014, 7
      %v2016 = vsub.s32 %v2013, %v2015
      %v2017 = vrot.slane %v1988, %v2016
      %v2020 = vunpack.c.l.s4 1983009808
      %v2021 = vunpack.c.0.s8 %v2020
      %v2022 = vlaneseq
      %v2023 = vshrl.u32 %v2022, 7
      %v2024 = vsub.s32 %v2021, %v2023
      %v2025 = vrot.slane %v1994, %v2024
      %v2026 = vcombine.low %v2017, %v2025
      %v2027 = vcombine.high %v2017, %v2025
      %v2029 = vunpack.c.l.s4 1934713408
      %v2030 = vunpack.c.0.s8 %v2029
      %v2031 = vlaneseq
      %v2032 = vshrl.u32 %v2031, 7
      %v2033 = vsub.s32 %v2030, %v2032
      %v2034 = vrot.slane %v2026, %v2033
      %v2036 = vunpack.c.l.s4 1934713408
      %v2037 = vunpack.c.0.s8 %v2036
      %v2038 = vlaneseq
      %v2039 = vshrl.u32 %v2038, 7
      %v2040 = vsub.s32 %v2037, %v2039
      %v2041 = vrot.slane %v2027, %v2040
      %v2042 = vcombine.high %v2034, 0
      %v2043 = vcombine.high %v2041, 0
      %v2046 = vunpack.c.l.s4 1983009808
      %v2047 = vunpack.c.0.s8 %v2046
      %v2048 = vlaneseq
      %v2049 = vshrl.u32 %v2048, 7
      %v2050 = vsub.s32 %v2047, %v2049
      %v2051 = vrot.slane %v1991, %v2050
      %v2054 = vunpack.c.l.s4 1983009808
      %v2055 = vunpack.c.0.s8 %v2054
      %v2056 = vlaneseq
      %v2057 = vshrl.u32 %v2056, 7
      %v2058 = vsub.s32 %v2055, %v2057
      %v2059 = vrot.slane %v1997, %v2058
      %v2060 = vcombine.low %v2051, %v2059
      %v2061 = vcombine.high %v2051, %v2059
      %v2063 = vunpack.c.l.s4 1934713408
      %v2064 = vunpack.c.0.s8 %v2063
      %v2065 = vlaneseq
      %v2066 = vshrl.u32 %v2065, 7
      %v2067 = vsub.s32 %v2064, %v2066
      %v2068 = vrot.slane %v2060, %v2067
      %v2070 = vunpack.c.l.s4 1934713408
      %v2071 = vunpack.c.0.s8 %v2070
      %v2072 = vlaneseq
      %v2073 = vshrl.u32 %v2072, 7
      %v2074 = vsub.s32 %v2071, %v2073
      %v2075 = vrot.slane %v2061, %v2074
      %v2076 = vcombine.high %v2068, 0
      %v2077 = vcombine.high %v2075, 0
      %v2080 = vunpack.c.l.s4 1983009808
      %v2081 = vunpack.c.0.s8 %v2080
      %v2082 = vlaneseq
      %v2083 = vshrl.u32 %v2082, 7
      %v2084 = vsub.s32 %v2081, %v2083
      %v2085 = vrot.slane %v2000, %v2084
      %v2088 = vunpack.c.l.s4 1983009808
      %v2089 = vunpack.c.0.s8 %v2088
      %v2090 = vlaneseq
      %v2091 = vshrl.u32 %v2090, 7
      %v2092 = vsub.s32 %v2089, %v2091
      %v2093 = vrot.slane %v2006, %v2092
      %v2094 = vcombine.low %v2085, %v2093
      %v2095 = vcombine.high %v2085, %v2093
      %v2097 = vunpack.c.l.s4 1934713408
      %v2098 = vunpack.c.0.s8 %v2097
      %v2099 = vlaneseq
      %v2100 = vshrl.u32 %v2099, 7
      %v2101 = vsub.s32 %v2098, %v2100
      %v2102 = vrot.slane %v2094, %v2101
      %v2104 = vunpack.c.l.s4 1934713408
      %v2105 = vunpack.c.0.s8 %v2104
      %v2106 = vlaneseq
      %v2107 = vshrl.u32 %v2106, 7
      %v2108 = vsub.s32 %v2105, %v2107
      %v2109 = vrot.slane %v2095, %v2108
      %v2110 = vcombine.high %v2102, 0
      %v2111 = vcombine.high %v2109, 0
      %v2114 = vunpack.c.l.s4 1983009808
      %v2115 = vunpack.c.0.s8 %v2114
      %v2116 = vlaneseq
      %v2117 = vshrl.u32 %v2116, 7
      %v2118 = vsub.s32 %v2115, %v2117
      %v2119 = vrot.slane %v2003, %v2118
      %v2122 = vunpack.c.l.s4 1983009808
      %v2123 = vunpack.c.0.s8 %v2122
      %v2124 = vlaneseq
      %v2125 = vshrl.u32 %v2124, 7
      %v2126 = vsub.s32 %v2123, %v2125
      %v2127 = vrot.slane %v2009, %v2126
      %v2128 = vcombine.low %v2119, %v2127
      %v2129 = vcombine.high %v2119, %v2127
      %v2131 = vunpack.c.l.s4 1934713408
      %v2132 = vunpack.c.0.s8 %v2131
      %v2133 = vlaneseq
      %v2134 = vshrl.u32 %v2133, 7
      %v2135 = vsub.s32 %v2132, %v2134
      %v2136 = vrot.slane %v2128, %v2135
      %v2138 = vunpack.c.l.s4 1934713408
      %v2139 = vunpack.c.0.s8 %v2138
      %v2140 = vlaneseq
      %v2141 = vshrl.u32 %v2140, 7
      %v2142 = vsub.s32 %v2139, %v2141
      %v2143 = vrot.slane %v2129, %v2142
      %v2144 = vcombine.high %v2136, 0
      %v2145 = vcombine.high %v2143, 0
      %v2147 = vunpack.c.l.b16 %v2068
      %v2148 = vpack.c.b16 %v2147, %v2147
      %2149 = vrot.lane.b32.xlu0 %v2148, 16
      %v2150 = vpop.permute.xlu0 %2149
      %v2152 = vunpack.c.l.b16 %v2042
      %v2153 = vpack.c.b16 %v2152, %v2152
      %2154 = vrot.lane.b32.xlu0 %v2153, 32
      %v2155 = vpop.permute.xlu0 %2154
      %v2157 = vunpack.c.l.b16 %v2076
      %v2158 = vpack.c.b16 %v2157, %v2157
      %2159 = vrot.lane.b32.xlu0 %v2158, 48
      %v2160 = vpop.permute.xlu0 %2159
      %v2162 = vunpack.c.l.b16 %v2041
      %v2163 = vpack.c.b16 %v2162, %v2162
      %2164 = vrot.lane.b32.xlu0 %v2163, 64
      %v2165 = vpop.permute.xlu0 %2164
      %v2167 = vunpack.c.l.b16 %v2075
      %v2168 = vpack.c.b16 %v2167, %v2167
      %2169 = vrot.lane.b32.xlu0 %v2168, 80
      %v2170 = vpop.permute.xlu0 %2169
      %v2172 = vunpack.c.l.b16 %v2043
      %v2173 = vpack.c.b16 %v2172, %v2172
      %2174 = vrot.lane.b32.xlu0 %v2173, 96
      %v2175 = vpop.permute.xlu0 %2174
      %v2177 = vunpack.c.l.b16 %v2077
      %v2178 = vpack.c.b16 %v2177, %v2177
      %2179 = vrot.lane.b32.xlu0 %v2178, 112
      %v2180 = vpop.permute.xlu0 %2179
      %v2182 = vunpack.c.l.b16 %v2136
      %v2183 = vpack.c.b16 %v2182, %v2182
      %2184 = vrot.lane.b32.xlu0 %v2183, 16
      %v2185 = vpop.permute.xlu0 %2184
      %v2187 = vunpack.c.l.b16 %v2110
      %v2188 = vpack.c.b16 %v2187, %v2187
      %2189 = vrot.lane.b32.xlu0 %v2188, 32
      %v2190 = vpop.permute.xlu0 %2189
      %v2192 = vunpack.c.l.b16 %v2144
      %v2193 = vpack.c.b16 %v2192, %v2192
      %2194 = vrot.lane.b32.xlu0 %v2193, 48
      %v2195 = vpop.permute.xlu0 %2194
      %v2197 = vunpack.c.l.b16 %v2109
      %v2198 = vpack.c.b16 %v2197, %v2197
      %2199 = vrot.lane.b32.xlu0 %v2198, 64
      %v2200 = vpop.permute.xlu0 %2199
      %v2202 = vunpack.c.l.b16 %v2143
      %v2203 = vpack.c.b16 %v2202, %v2202
      %2204 = vrot.lane.b32.xlu0 %v2203, 80
      %v2205 = vpop.permute.xlu0 %2204
      %v2207 = vunpack.c.l.b16 %v2111
      %v2208 = vpack.c.b16 %v2207, %v2207
      %2209 = vrot.lane.b32.xlu0 %v2208, 96
      %v2210 = vpop.permute.xlu0 %2209
      %v2212 = vunpack.c.l.b16 %v2145
      %v2213 = vpack.c.b16 %v2212, %v2212
      %2214 = vrot.lane.b32.xlu0 %v2213, 112
      %v2215 = vpop.permute.xlu0 %2214
      %v2218 = vsel %vm447, %v2034, %v2150
      %v2220 = vsel %vm451, %v2218, %v2155
      %v2222 = vsel %vm454, %v2220, %v2160
      %v2224 = vsel %vm457, %v2222, %v2165
      %v2226 = vsel %vm460, %v2224, %v2170
      %v2228 = vsel %vm463, %v2226, %v2175
      %v2230 = vsel %vm466, %v2228, %v2180
      %v2233 = vsel %vm447, %v2102, %v2185
      %v2235 = vsel %vm451, %v2233, %v2190
      %v2237 = vsel %vm454, %v2235, %v2195
      %v2239 = vsel %vm457, %v2237, %v2200
      %v2241 = vsel %vm460, %v2239, %v2205
      %v2243 = vsel %vm463, %v2241, %v2210
      %v2245 = vsel %vm466, %v2243, %v2215
      %2246 = vrot.lane.b32.xlu0 %v1961, 127
      %v2247 = vpop.permute.xlu0 %2246
      %2248 = vrot.lane.b32.xlu0 %v1964, 127
      %v2249 = vpop.permute.xlu0 %2248
      %2250 = vrot.lane.b32.xlu0 %v1968, 127
      %v2251 = vpop.permute.xlu0 %2250
      %2252 = vrot.lane.b32.xlu0 %v1971, 127
      %v2253 = vpop.permute.xlu0 %2252
      %2254 = vrot.lane.b32.xlu0 %v1975, 127
      %v2255 = vpop.permute.xlu0 %2254
      %2256 = vrot.lane.b32.xlu0 %v1978, 127
      %v2257 = vpop.permute.xlu0 %2256
      %2258 = vrot.lane.b32.xlu0 %v1982, 127
      %v2259 = vpop.permute.xlu0 %2258
      %2260 = vrot.lane.b32.xlu0 %v1985, 127
      %v2261 = vpop.permute.xlu0 %2260
      %v2264 = vpack.i.b16 %v2251, %v2247
      %v2265 = vshrl.u32 %v2247, 16
      %v2266 = vshrl.u32 %v2251, 16
      %v2267 = vpack.i.b16 %v2266, %v2265
      %v2270 = vpack.i.b16 %v2259, %v2255
      %v2271 = vshrl.u32 %v2255, 16
      %v2272 = vshrl.u32 %v2259, 16
      %v2273 = vpack.i.b16 %v2272, %v2271
      %v2276 = vpack.i.b16 %v2253, %v2249
      %v2277 = vshrl.u32 %v2249, 16
      %v2278 = vshrl.u32 %v2253, 16
      %v2279 = vpack.i.b16 %v2278, %v2277
      %v2282 = vpack.i.b16 %v2261, %v2257
      %v2283 = vshrl.u32 %v2257, 16
      %v2284 = vshrl.u32 %v2261, 16
      %v2285 = vpack.i.b16 %v2284, %v2283
      %v2288 = vunpack.c.l.s4 1983009808
      %v2289 = vunpack.c.0.s8 %v2288
      %v2290 = vlaneseq
      %v2291 = vshrl.u32 %v2290, 7
      %v2292 = vsub.s32 %v2289, %v2291
      %v2293 = vrot.slane %v2264, %v2292
      %v2296 = vunpack.c.l.s4 1983009808
      %v2297 = vunpack.c.0.s8 %v2296
      %v2298 = vlaneseq
      %v2299 = vshrl.u32 %v2298, 7
      %v2300 = vsub.s32 %v2297, %v2299
      %v2301 = vrot.slane %v2270, %v2300
      %v2302 = vcombine.low %v2293, %v2301
      %v2303 = vcombine.high %v2293, %v2301
      %v2305 = vunpack.c.l.s4 1934713408
      %v2306 = vunpack.c.0.s8 %v2305
      %v2307 = vlaneseq
      %v2308 = vshrl.u32 %v2307, 7
      %v2309 = vsub.s32 %v2306, %v2308
      %v2310 = vrot.slane %v2302, %v2309
      %v2312 = vunpack.c.l.s4 1934713408
      %v2313 = vunpack.c.0.s8 %v2312
      %v2314 = vlaneseq
      %v2315 = vshrl.u32 %v2314, 7
      %v2316 = vsub.s32 %v2313, %v2315
      %v2317 = vrot.slane %v2303, %v2316
      %v2318 = vcombine.high %v2310, 0
      %v2319 = vcombine.high %v2317, 0
      %v2322 = vunpack.c.l.s4 1983009808
      %v2323 = vunpack.c.0.s8 %v2322
      %v2324 = vlaneseq
      %v2325 = vshrl.u32 %v2324, 7
      %v2326 = vsub.s32 %v2323, %v2325
      %v2327 = vrot.slane %v2267, %v2326
      %v2330 = vunpack.c.l.s4 1983009808
      %v2331 = vunpack.c.0.s8 %v2330
      %v2332 = vlaneseq
      %v2333 = vshrl.u32 %v2332, 7
      %v2334 = vsub.s32 %v2331, %v2333
      %v2335 = vrot.slane %v2273, %v2334
      %v2336 = vcombine.low %v2327, %v2335
      %v2337 = vcombine.high %v2327, %v2335
      %v2339 = vunpack.c.l.s4 1934713408
      %v2340 = vunpack.c.0.s8 %v2339
      %v2341 = vlaneseq
      %v2342 = vshrl.u32 %v2341, 7
      %v2343 = vsub.s32 %v2340, %v2342
      %v2344 = vrot.slane %v2336, %v2343
      %v2346 = vunpack.c.l.s4 1934713408
      %v2347 = vunpack.c.0.s8 %v2346
      %v2348 = vlaneseq
      %v2349 = vshrl.u32 %v2348, 7
      %v2350 = vsub.s32 %v2347, %v2349
      %v2351 = vrot.slane %v2337, %v2350
      %v2352 = vcombine.high %v2344, 0
      %v2353 = vcombine.high %v2351, 0
      %v2356 = vunpack.c.l.s4 1983009808
      %v2357 = vunpack.c.0.s8 %v2356
      %v2358 = vlaneseq
      %v2359 = vshrl.u32 %v2358, 7
      %v2360 = vsub.s32 %v2357, %v2359
      %v2361 = vrot.slane %v2276, %v2360
      %v2364 = vunpack.c.l.s4 1983009808
      %v2365 = vunpack.c.0.s8 %v2364
      %v2366 = vlaneseq
      %v2367 = vshrl.u32 %v2366, 7
      %v2368 = vsub.s32 %v2365, %v2367
      %v2369 = vrot.slane %v2282, %v2368
      %v2370 = vcombine.low %v2361, %v2369
      %v2371 = vcombine.high %v2361, %v2369
      %v2373 = vunpack.c.l.s4 1934713408
      %v2374 = vunpack.c.0.s8 %v2373
      %v2375 = vlaneseq
      %v2376 = vshrl.u32 %v2375, 7
      %v2377 = vsub.s32 %v2374, %v2376
      %v2378 = vrot.slane %v2370, %v2377
      %v2380 = vunpack.c.l.s4 1934713408
      %v2381 = vunpack.c.0.s8 %v2380
      %v2382 = vlaneseq
      %v2383 = vshrl.u32 %v2382, 7
      %v2384 = vsub.s32 %v2381, %v2383
      %v2385 = vrot.slane %v2371, %v2384
      %v2386 = vcombine.high %v2378, 0
      %v2387 = vcombine.high %v2385, 0
      %v2390 = vunpack.c.l.s4 1983009808
      %v2391 = vunpack.c.0.s8 %v2390
      %v2392 = vlaneseq
      %v2393 = vshrl.u32 %v2392, 7
      %v2394 = vsub.s32 %v2391, %v2393
      %v2395 = vrot.slane %v2279, %v2394
      %v2398 = vunpack.c.l.s4 1983009808
      %v2399 = vunpack.c.0.s8 %v2398
      %v2400 = vlaneseq
      %v2401 = vshrl.u32 %v2400, 7
      %v2402 = vsub.s32 %v2399, %v2401
      %v2403 = vrot.slane %v2285, %v2402
      %v2404 = vcombine.low %v2395, %v2403
      %v2405 = vcombine.high %v2395, %v2403
      %v2407 = vunpack.c.l.s4 1934713408
      %v2408 = vunpack.c.0.s8 %v2407
      %v2409 = vlaneseq
      %v2410 = vshrl.u32 %v2409, 7
      %v2411 = vsub.s32 %v2408, %v2410
      %v2412 = vrot.slane %v2404, %v2411
      %v2414 = vunpack.c.l.s4 1934713408
      %v2415 = vunpack.c.0.s8 %v2414
      %v2416 = vlaneseq
      %v2417 = vshrl.u32 %v2416, 7
      %v2418 = vsub.s32 %v2415, %v2417
      %v2419 = vrot.slane %v2405, %v2418
      %v2420 = vcombine.high %v2412, 0
      %v2421 = vcombine.high %v2419, 0
      %v2423 = vunpack.c.l.b16 %v2344
      %v2424 = vpack.c.b16 %v2423, %v2423
      %2425 = vrot.lane.b32.xlu0 %v2424, 16
      %v2426 = vpop.permute.xlu0 %2425
      %v2428 = vunpack.c.l.b16 %v2318
      %v2429 = vpack.c.b16 %v2428, %v2428
      %2430 = vrot.lane.b32.xlu0 %v2429, 32
      %v2431 = vpop.permute.xlu0 %2430
      %v2433 = vunpack.c.l.b16 %v2352
      %v2434 = vpack.c.b16 %v2433, %v2433
      %2435 = vrot.lane.b32.xlu0 %v2434, 48
      %v2436 = vpop.permute.xlu0 %2435
      %v2438 = vunpack.c.l.b16 %v2317
      %v2439 = vpack.c.b16 %v2438, %v2438
      %2440 = vrot.lane.b32.xlu0 %v2439, 64
      %v2441 = vpop.permute.xlu0 %2440
      %v2443 = vunpack.c.l.b16 %v2351
      %v2444 = vpack.c.b16 %v2443, %v2443
      %2445 = vrot.lane.b32.xlu0 %v2444, 80
      %v2446 = vpop.permute.xlu0 %2445
      %v2448 = vunpack.c.l.b16 %v2319
      %v2449 = vpack.c.b16 %v2448, %v2448
      %2450 = vrot.lane.b32.xlu0 %v2449, 96
      %v2451 = vpop.permute.xlu0 %2450
      %v2453 = vunpack.c.l.b16 %v2353
      %v2454 = vpack.c.b16 %v2453, %v2453
      %2455 = vrot.lane.b32.xlu0 %v2454, 112
      %v2456 = vpop.permute.xlu0 %2455
      %v2458 = vunpack.c.l.b16 %v2412
      %v2459 = vpack.c.b16 %v2458, %v2458
      %2460 = vrot.lane.b32.xlu0 %v2459, 16
      %v2461 = vpop.permute.xlu0 %2460
      %v2463 = vunpack.c.l.b16 %v2386
      %v2464 = vpack.c.b16 %v2463, %v2463
      %2465 = vrot.lane.b32.xlu0 %v2464, 32
      %v2466 = vpop.permute.xlu0 %2465
      %v2468 = vunpack.c.l.b16 %v2420
      %v2469 = vpack.c.b16 %v2468, %v2468
      %2470 = vrot.lane.b32.xlu0 %v2469, 48
      %v2471 = vpop.permute.xlu0 %2470
      %v2473 = vunpack.c.l.b16 %v2385
      %v2474 = vpack.c.b16 %v2473, %v2473
      %2475 = vrot.lane.b32.xlu0 %v2474, 64
      %v2476 = vpop.permute.xlu0 %2475
      %v2478 = vunpack.c.l.b16 %v2419
      %v2479 = vpack.c.b16 %v2478, %v2478
      %2480 = vrot.lane.b32.xlu0 %v2479, 80
      %v2481 = vpop.permute.xlu0 %2480
      %v2483 = vunpack.c.l.b16 %v2387
      %v2484 = vpack.c.b16 %v2483, %v2483
      %2485 = vrot.lane.b32.xlu0 %v2484, 96
      %v2486 = vpop.permute.xlu0 %2485
      %v2488 = vunpack.c.l.b16 %v2421
      %v2489 = vpack.c.b16 %v2488, %v2488
      %2490 = vrot.lane.b32.xlu0 %v2489, 112
      %v2491 = vpop.permute.xlu0 %2490
      %v2494 = vsel %vm447, %v2310, %v2426
      %v2496 = vsel %vm451, %v2494, %v2431
      %v2498 = vsel %vm454, %v2496, %v2436
      %v2500 = vsel %vm457, %v2498, %v2441
      %v2502 = vsel %vm460, %v2500, %v2446
      %v2504 = vsel %vm463, %v2502, %v2451
      %v2506 = vsel %vm466, %v2504, %v2456
      %v2509 = vsel %vm447, %v2378, %v2461
      %v2511 = vsel %vm451, %v2509, %v2466
      %v2513 = vsel %vm454, %v2511, %v2471
      %v2515 = vsel %vm457, %v2513, %v2476
      %v2517 = vsel %vm460, %v2515, %v2481
      %v2519 = vsel %vm463, %v2517, %v2486
      %v2521 = vsel %vm466, %v2519, %v2491
      %2522 = vrot.lane.b32.xlu0 %v1961, 126
      %v2523 = vpop.permute.xlu0 %2522
      %2524 = vrot.lane.b32.xlu0 %v1964, 126
      %v2525 = vpop.permute.xlu0 %2524
      %2526 = vrot.lane.b32.xlu0 %v1968, 126
      %v2527 = vpop.permute.xlu0 %2526
      %2528 = vrot.lane.b32.xlu0 %v1971, 126
      %v2529 = vpop.permute.xlu0 %2528
      %2530 = vrot.lane.b32.xlu0 %v1975, 126
      %v2531 = vpop.permute.xlu0 %2530
      %2532 = vrot.lane.b32.xlu0 %v1978, 126
      %v2533 = vpop.permute.xlu0 %2532
      %2534 = vrot.lane.b32.xlu0 %v1982, 126
      %v2535 = vpop.permute.xlu0 %2534
      %2536 = vrot.lane.b32.xlu0 %v1985, 126
      %v2537 = vpop.permute.xlu0 %2536
      %v2540 = vpack.i.b16 %v2527, %v2523
      %v2541 = vshrl.u32 %v2523, 16
      %v2542 = vshrl.u32 %v2527, 16
      %v2543 = vpack.i.b16 %v2542, %v2541
      %v2546 = vpack.i.b16 %v2535, %v2531
      %v2547 = vshrl.u32 %v2531, 16
      %v2548 = vshrl.u32 %v2535, 16
      %v2549 = vpack.i.b16 %v2548, %v2547
      %v2552 = vpack.i.b16 %v2529, %v2525
      %v2553 = vshrl.u32 %v2525, 16
      %v2554 = vshrl.u32 %v2529, 16
      %v2555 = vpack.i.b16 %v2554, %v2553
      %v2558 = vpack.i.b16 %v2537, %v2533
      %v2559 = vshrl.u32 %v2533, 16
      %v2560 = vshrl.u32 %v2537, 16
      %v2561 = vpack.i.b16 %v2560, %v2559
      %v2564 = vunpack.c.l.s4 1983009808
      %v2565 = vunpack.c.0.s8 %v2564
      %v2566 = vlaneseq
      %v2567 = vshrl.u32 %v2566, 7
      %v2568 = vsub.s32 %v2565, %v2567
      %v2569 = vrot.slane %v2540, %v2568
      %v2572 = vunpack.c.l.s4 1983009808
      %v2573 = vunpack.c.0.s8 %v2572
      %v2574 = vlaneseq
      %v2575 = vshrl.u32 %v2574, 7
      %v2576 = vsub.s32 %v2573, %v2575
      %v2577 = vrot.slane %v2546, %v2576
      %v2578 = vcombine.low %v2569, %v2577
      %v2579 = vcombine.high %v2569, %v2577
      %v2581 = vunpack.c.l.s4 1934713408
      %v2582 = vunpack.c.0.s8 %v2581
      %v2583 = vlaneseq
      %v2584 = vshrl.u32 %v2583, 7
      %v2585 = vsub.s32 %v2582, %v2584
      %v2586 = vrot.slane %v2578, %v2585
      %v2588 = vunpack.c.l.s4 1934713408
      %v2589 = vunpack.c.0.s8 %v2588
      %v2590 = vlaneseq
      %v2591 = vshrl.u32 %v2590, 7
      %v2592 = vsub.s32 %v2589, %v2591
      %v2593 = vrot.slane %v2579, %v2592
      %v2594 = vcombine.high %v2586, 0
      %v2595 = vcombine.high %v2593, 0
      %v2598 = vunpack.c.l.s4 1983009808
      %v2599 = vunpack.c.0.s8 %v2598
      %v2600 = vlaneseq
      %v2601 = vshrl.u32 %v2600, 7
      %v2602 = vsub.s32 %v2599, %v2601
      %v2603 = vrot.slane %v2543, %v2602
      %v2606 = vunpack.c.l.s4 1983009808
      %v2607 = vunpack.c.0.s8 %v2606
      %v2608 = vlaneseq
      %v2609 = vshrl.u32 %v2608, 7
      %v2610 = vsub.s32 %v2607, %v2609
      %v2611 = vrot.slane %v2549, %v2610
      %v2612 = vcombine.low %v2603, %v2611
      %v2613 = vcombine.high %v2603, %v2611
      %v2615 = vunpack.c.l.s4 1934713408
      %v2616 = vunpack.c.0.s8 %v2615
      %v2617 = vlaneseq
      %v2618 = vshrl.u32 %v2617, 7
      %v2619 = vsub.s32 %v2616, %v2618
      %v2620 = vrot.slane %v2612, %v2619
      %v2622 = vunpack.c.l.s4 1934713408
      %v2623 = vunpack.c.0.s8 %v2622
      %v2624 = vlaneseq
      %v2625 = vshrl.u32 %v2624, 7
      %v2626 = vsub.s32 %v2623, %v2625
      %v2627 = vrot.slane %v2613, %v2626
      %v2628 = vcombine.high %v2620, 0
      %v2629 = vcombine.high %v2627, 0
      %v2632 = vunpack.c.l.s4 1983009808
      %v2633 = vunpack.c.0.s8 %v2632
      %v2634 = vlaneseq
      %v2635 = vshrl.u32 %v2634, 7
      %v2636 = vsub.s32 %v2633, %v2635
      %v2637 = vrot.slane %v2552, %v2636
      %v2640 = vunpack.c.l.s4 1983009808
      %v2641 = vunpack.c.0.s8 %v2640
      %v2642 = vlaneseq
      %v2643 = vshrl.u32 %v2642, 7
      %v2644 = vsub.s32 %v2641, %v2643
      %v2645 = vrot.slane %v2558, %v2644
      %v2646 = vcombine.low %v2637, %v2645
      %v2647 = vcombine.high %v2637, %v2645
      %v2649 = vunpack.c.l.s4 1934713408
      %v2650 = vunpack.c.0.s8 %v2649
      %v2651 = vlaneseq
      %v2652 = vshrl.u32 %v2651, 7
      %v2653 = vsub.s32 %v2650, %v2652
      %v2654 = vrot.slane %v2646, %v2653
      %v2656 = vunpack.c.l.s4 1934713408
      %v2657 = vunpack.c.0.s8 %v2656
      %v2658 = vlaneseq
      %v2659 = vshrl.u32 %v2658, 7
      %v2660 = vsub.s32 %v2657, %v2659
      %v2661 = vrot.slane %v2647, %v2660
      %v2662 = vcombine.high %v2654, 0
      %v2663 = vcombine.high %v2661, 0
      %v2666 = vunpack.c.l.s4 1983009808
      %v2667 = vunpack.c.0.s8 %v2666
      %v2668 = vlaneseq
      %v2669 = vshrl.u32 %v2668, 7
      %v2670 = vsub.s32 %v2667, %v2669
      %v2671 = vrot.slane %v2555, %v2670
      %v2674 = vunpack.c.l.s4 1983009808
      %v2675 = vunpack.c.0.s8 %v2674
      %v2676 = vlaneseq
      %v2677 = vshrl.u32 %v2676, 7
      %v2678 = vsub.s32 %v2675, %v2677
      %v2679 = vrot.slane %v2561, %v2678
      %v2680 = vcombine.low %v2671, %v2679
      %v2681 = vcombine.high %v2671, %v2679
      %v2683 = vunpack.c.l.s4 1934713408
      %v2684 = vunpack.c.0.s8 %v2683
      %v2685 = vlaneseq
      %v2686 = vshrl.u32 %v2685, 7
      %v2687 = vsub.s32 %v2684, %v2686
      %v2688 = vrot.slane %v2680, %v2687
      %v2690 = vunpack.c.l.s4 1934713408
      %v2691 = vunpack.c.0.s8 %v2690
      %v2692 = vlaneseq
      %v2693 = vshrl.u32 %v2692, 7
      %v2694 = vsub.s32 %v2691, %v2693
      %v2695 = vrot.slane %v2681, %v2694
      %v2696 = vcombine.high %v2688, 0
      %v2697 = vcombine.high %v2695, 0
      %v2699 = vunpack.c.l.b16 %v2620
      %v2700 = vpack.c.b16 %v2699, %v2699
      %2701 = vrot.lane.b32.xlu0 %v2700, 16
      %v2702 = vpop.permute.xlu0 %2701
      %v2704 = vunpack.c.l.b16 %v2594
      %v2705 = vpack.c.b16 %v2704, %v2704
      %2706 = vrot.lane.b32.xlu0 %v2705, 32
      %v2707 = vpop.permute.xlu0 %2706
      %v2709 = vunpack.c.l.b16 %v2628
      %v2710 = vpack.c.b16 %v2709, %v2709
      %2711 = vrot.lane.b32.xlu0 %v2710, 48
      %v2712 = vpop.permute.xlu0 %2711
      %v2714 = vunpack.c.l.b16 %v2593
      %v2715 = vpack.c.b16 %v2714, %v2714
      %2716 = vrot.lane.b32.xlu0 %v2715, 64
      %v2717 = vpop.permute.xlu0 %2716
      %v2719 = vunpack.c.l.b16 %v2627
      %v2720 = vpack.c.b16 %v2719, %v2719
      %2721 = vrot.lane.b32.xlu0 %v2720, 80
      %v2722 = vpop.permute.xlu0 %2721
      %v2724 = vunpack.c.l.b16 %v2595
      %v2725 = vpack.c.b16 %v2724, %v2724
      %2726 = vrot.lane.b32.xlu0 %v2725, 96
      %v2727 = vpop.permute.xlu0 %2726
      %v2729 = vunpack.c.l.b16 %v2629
      %v2730 = vpack.c.b16 %v2729, %v2729
      %2731 = vrot.lane.b32.xlu0 %v2730, 112
      %v2732 = vpop.permute.xlu0 %2731
      %v2734 = vunpack.c.l.b16 %v2688
      %v2735 = vpack.c.b16 %v2734, %v2734
      %2736 = vrot.lane.b32.xlu0 %v2735, 16
      %v2737 = vpop.permute.xlu0 %2736
      %v2739 = vunpack.c.l.b16 %v2662
      %v2740 = vpack.c.b16 %v2739, %v2739
      %2741 = vrot.lane.b32.xlu0 %v2740, 32
      %v2742 = vpop.permute.xlu0 %2741
      %v2744 = vunpack.c.l.b16 %v2696
      %v2745 = vpack.c.b16 %v2744, %v2744
      %2746 = vrot.lane.b32.xlu0 %v2745, 48
      %v2747 = vpop.permute.xlu0 %2746
      %v2749 = vunpack.c.l.b16 %v2661
      %v2750 = vpack.c.b16 %v2749, %v2749
      %2751 = vrot.lane.b32.xlu0 %v2750, 64
      %v2752 = vpop.permute.xlu0 %2751
      %v2754 = vunpack.c.l.b16 %v2695
      %v2755 = vpack.c.b16 %v2754, %v2754
      %2756 = vrot.lane.b32.xlu0 %v2755, 80
      %v2757 = vpop.permute.xlu0 %2756
      %v2759 = vunpack.c.l.b16 %v2663
      %v2760 = vpack.c.b16 %v2759, %v2759
      %2761 = vrot.lane.b32.xlu0 %v2760, 96
      %v2762 = vpop.permute.xlu0 %2761
      %v2764 = vunpack.c.l.b16 %v2697
      %v2765 = vpack.c.b16 %v2764, %v2764
      %2766 = vrot.lane.b32.xlu0 %v2765, 112
      %v2767 = vpop.permute.xlu0 %2766
      %v2770 = vsel %vm447, %v2586, %v2702
      %v2772 = vsel %vm451, %v2770, %v2707
      %v2774 = vsel %vm454, %v2772, %v2712
      %v2776 = vsel %vm457, %v2774, %v2717
      %v2778 = vsel %vm460, %v2776, %v2722
      %v2780 = vsel %vm463, %v2778, %v2727
      %v2782 = vsel %vm466, %v2780, %v2732
      %v2785 = vsel %vm447, %v2654, %v2737
      %v2787 = vsel %vm451, %v2785, %v2742
      %v2789 = vsel %vm454, %v2787, %v2747
      %v2791 = vsel %vm457, %v2789, %v2752
      %v2793 = vsel %vm460, %v2791, %v2757
      %v2795 = vsel %vm463, %v2793, %v2762
      %v2797 = vsel %vm466, %v2795, %v2767
      %v2800 = vrot.slane %v752, 6
      %v2801 = vrot.slane %v767, 6
      %v2804 = vrot.slane %v1028, 4
      %v2805 = vrot.slane %v1043, 4
      %v2808 = vrot.slane %v1375, 2
      %v2809 = vrot.slane %v1390, 2
      %v2812 = vrot.slane %v1927, 6
      %v2813 = vrot.slane %v1942, 6
      %v2816 = vrot.slane %v2230, 4
      %v2817 = vrot.slane %v2245, 4
      %v2820 = vrot.slane %v2506, 2
      %v2821 = vrot.slane %v2521, 2
      %vm2822 = vcmask 1041408
      %v2824 = vsel %vm2822, %v468, %v2800
      %v2826 = vsel %vm2822, %v483, %v2801
      %vm2827 = vcmask 1043456
      %v2829 = vsel %vm2827, %v2824, %v2804
      %v2831 = vsel %vm2827, %v2826, %v2805
      %vm2832 = vcmask 1045504
      %v2834 = vsel %vm2832, %v2829, %v2808
      %v2837 = vsel %vm2832, %v2831, %v2809
      %v2840 = vsel %vm2822, %v1651, %v2812
      %v2842 = vsel %vm2822, %v1666, %v2813
      %v2844 = vsel %vm2827, %v2840, %v2816
      %v2846 = vsel %vm2827, %v2842, %v2817
      %v2848 = vsel %vm2832, %v2844, %v2820
      %v2851 = vsel %vm2832, %v2846, %v2821
      %v2853 = vld [vmem:[%s0] sm:$0xf]
      %v2854 = vld [vmem:[%s0 + $0x4] sm:$0xf]
      %v2855 = vld [vmem:[%s1] sm:$0xff]
      %v2856 = vld [vmem:[%s1 + $0x8] sm:$0xff]
      %2858 = vset.pattern.permute.xlu0 0
      %2859 = vperm.xlu0 %2858, %v2855
      %v2860 = vpop.permute.xlu0 %2859
      %2863 = vset.pattern.permute.xlu0 0
      %2864 = vperm.xlu0 %2863, %v2856
      %v2865 = vpop.permute.xlu0 %2864
      %v2869 = vunpack.c.l.b16 %v2853
      %v2870 = vunpack.c.l.b16 %v2854
      %v2871 = vpack.c.b16 %v2870, %v2869
      %vm2872 = vcmask 293888
      %v2874 = vsel %vm2872, %v2871, 0
      %v2876 = vsel %vm2822, %v2782, 0
      %v2878 = vsel %vm2822, %v2797, 0
      %2880 = vmatprep.subr.bf16.mxu0 %v2837
      %2881 = vmatpush1.bf16.msra.mxu0 %v2834
      %2882 = vmatprep.subr.bf16.mxu0 %v2851
      %2883 = vmatpush1.bf16.msra.mxu0 %v2848
      %2884 = vmatprep.subr.bf16.mxu0 %v2878
      %2885 = vmatpush1.bf16.msra.mxu0 %v2876
      %2886 = vmatprep.subr.bf16.mxu0 0
      %2887 = vmatpush1.bf16.msra.mxu0 0
      %2888 = vmatprep.subr.bf16.mxu0 0
      %2889 = vmatpush1.bf16.msra.mxu0 0
      %2890 = vmatprep.subr.bf16.mxu0 0
      %2891 = vmatpush1.bf16.msra.mxu0 0
      %2892 = vmatprep.subr.bf16.mxu0 0
      %2893 = vmatpush1.bf16.msra.mxu0 0
      %2894 = vmatprep.subr.bf16.mxu0 0
      %2895 = vmatpush1.bf16.msra.mxu0 0
      %2896 = vmatprep.subr.bf16.mxu0 0
      %2897 = vmatpush1.bf16.msra.mxu0 0
      %2898 = vmatprep.subr.bf16.mxu0 0
      %2899 = vmatpush1.bf16.msra.mxu0 0
      %2900 = vmatprep.subr.bf16.mxu0 0
      %2901 = vmatpush1.bf16.msra.mxu0 0
      %2902 = vmatprep.subr.bf16.mxu0 0
      %2903 = vmatpush1.bf16.msra.mxu0 0
      %2904 = vmatprep.subr.bf16.mxu0 0
      %2905 = vmatpush1.bf16.msra.mxu0 0
      %2906 = vmatprep.subr.bf16.mxu0 0
      %2907 = vmatpush1.bf16.msra.mxu0 0
      %2908 = vmatprep.subr.bf16.mxu0 0
      %2909 = vmatpush1.bf16.msra.mxu0 0
      %2910 = vmatprep.subr.bf16.mxu0 0
      %2911 = vmatpush1.bf16.msra.mxu0 0
      %2912 = vmatprep.mubr.bf16.mxu0 0
      %2913 = vmatmul.mubr.bf16.gmra.mrb[0].mxu0 %v2874
      %v2914 = vpop.f32.mrb[0].mxu0
      %v2915 = vadd.f32 %v2860, %v2914
      %v2916 = vpop.f32.mrb[0].mxu0
      %v2917 = vadd.f32 %v2860, %v2916
      %v2918 = vpop.f32.mrb[0].mxu0
      %v2919 = vadd.f32 %v2865, %v2918
      %v2920 = vpop.f32.mrb[0].mxu0
      %v2921 = vadd.f32 %v2865, %v2920
      %2922 = vdwg.mxu0
      %v2923 = vsub.f32 0.0, %v2915
      %v2924 = vsub.f32 0.0, %v2917
      %v2925 = vsub.f32 0.0, %v2919
      %v2926 = vsub.f32 0.0, %v2921
      %v2927 = vmul.f32 %v2923, 1.442695
      %v2928 = vpow.pop %v2927
      %v2929 = vmul.f32 %v2924, 1.442695
      %v2930 = vpow.pop %v2929
      %v2931 = vmul.f32 %v2925, 1.442695
      %v2932 = vpow.pop %v2931
      %v2933 = vmul.f32 %v2926, 1.442695
      %v2934 = vpow.pop %v2933
      %v2935 = vadd.f32 %v2928, 1.0
      %v2936 = vadd.f32 %v2930, 1.0
      %v2937 = vadd.f32 %v2932, 1.0
      %v2938 = vadd.f32 %v2934, 1.0
      %v2939 = vrcp.pop %v2935
      %v2940 = vrcp.pop %v2936
      %v2941 = vrcp.pop %v2937
      %v2942 = vrcp.pop %v2938
      %v2943 = vmul.f32 %v2915, %v2939
      %v2944 = vmul.f32 %v2917, %v2940
      %v2945 = vmul.f32 %v2919, %v2941
      %v2946 = vmul.f32 %v2921, %v2942
      %v2947 = vpack.c.bf16 %v2945, %v2943
      %v2948 = vpack.c.bf16 %v2946, %v2944
      %v2951 = vunpack.c.l.b16 %v2947
      %v2952 = vunpack.c.l.b16 %v2948
      %v2953 = vunpack.c.h.b16 %v2947
      %v2954 = vunpack.c.h.b16 %v2948
      %v2955 = vpack.c.b16 %v2952, %v2951
      %v2956 = vpack.c.b16 %v2954, %v2953
      %2959 = vst [vmem:[%s206] sm:$0xff] %v2955
      %2960 = vst [vmem:[%s206 + $0x8] sm:$0xff] %v2956
      %s2961 = smul.u32 2, %s19
      %p2962 = scmp.lt.s32.totalorder %s18, 1
      %s2963 = scalar_select %p2962, %s18, 1
      %p2964 = scmp.lt.s32.totalorder %s2961, 1
      %s2965 = scalar_select %p2964, %s2961, 1
      %s2966 = smul.addr %s2963, 4
      %s2967 = sadd.s32 %s2965, %s2966
      %s2968 = smul.addr %s2967, 4
      %s2969 = scalar_lea.vmem %s3, %s2968
      // Predicated region
      $region33: #{upsample_block.1} parent=31 // pred_check
        %p2970 = pneg %p116
      $region34: #{upsample_block.1} parent=31 // pred_check_branch
        %2972 = sbr.rel (%p2970) target = $region36
      $region35: #{upsample_block.1} parent=31 // pred_region
        %s2973 = smul.u32 2, %s19
      $region36: #{upsample_block.1} parent=31 // pred_fallthru
        _
    $region32: #{upsample_block.1} parent=5 // pred_fallthru
      _
    %p2974 = scmp.le.s32.totalorder 2, %s9
    // Predicated region
    $region37: #{upsample_block.1} parent=5 // pred_check
      %p2975 = pneg %p2974
    $region38: #{upsample_block.1} parent=5 // pred_check_branch
      %2977 = sbr.rel (%p2975) target = $region40
    $region39: #{upsample_block.1} parent=5 // pred_region
      %s2978 = ssub.s32 %s9, 2
      // Predicated region
      $region41: #{upsample_block.1} parent=39 // pred_check
        %p2979 = pneg %p122
      $region42: #{upsample_block.1} parent=39 // pred_check_branch
        %2981 = sbr.rel (%p2979) target = $region44
      $region43: #{upsample_block.1} parent=39 // pred_region
        %s2982 = smul.u32 2, %s21
        %p2983 = scmp.lt.s32.totalorder %s20, 1
        %s2984 = scalar_select %p2983, %s20, 1
        %p2985 = scmp.lt.s32.totalorder %s2982, 1
        %s2986 = scalar_select %p2985, %s2982, 1
        %s2987 = smul.addr %s2984, 4
        %s2988 = sadd.s32 %s2986, %s2987
        %s2989 = smul.addr %s2988, 4
        %s2990 = scalar_lea.vmem %s3, %s2989
      $region44: #{upsample_block.1} parent=39 // pred_fallthru
        _
    $region40: #{upsample_block.1} parent=5 // pred_fallthru
      _
  $region6: #{upsample_block.1} parent=0 // loop_footer
    %s13 = sadd.s32 1, %s9
  $region7: #{upsample_block.1} parent=0 // loop_footer_branch
    %8 = sbr.rel target = $region3
  $region8: #{upsample_block.1} parent=0 // loop_exit
    _

</llo_original>
